<compile_context>
chip_gen: v7x
topology: tpu7x:2x2x1
jax: 0.10.0
libtpu: 0.0.40
codegen_flags: <defaults>
</compile_context>

<pallas_src>
import functools
import math

import jax
import jax.numpy as jnp
from jax import lax
from jax.experimental import pallas as pl
from jax.experimental.pallas import tpu as pltpu

_LN_EPS = 1e-5                       # nn.LayerNorm default


# --------------------------------------------------------------------------- config
def _vmem_capacity_bytes():
    try:
        cap = getattr(pltpu.get_tpu_info(), "vmem_capacity_bytes", None)
        if cap:
            return int(cap)
    except Exception:
        pass
    return 64 * 1024 * 1024          # conservative fallback (v7x physical VMEM)


def _tpu_cfg():
    cap = _vmem_capacity_bytes()
    big = cap >= 96 * 1024 * 1024    # v5e / v6e (128 MiB) vs v7x (64 MiB)
    return {
        "vmem_limit": cap * 3 // 4,          # ~96 MiB on v5e/v6e, ~48 MiB on v7x
        "tm_target": 1024 if big else 256,   # MLP / LM-head / LN row tiles
        "tq_target": 512 if big else 256,    # attention query tiles
        "tf_target": 2048 if big else 512,   # MLP d_ff tiles
        "tn_target": 2048 if big else 1024,  # LM-head vocab tiles
    }


_CFG = _tpu_cfg()


# --------------------------------------------------------------------------- helpers
def _layernorm(x, w, b):
    mu = jnp.mean(x, axis=-1, keepdims=True)
    var = jnp.mean(jnp.square(x - mu), axis=-1, keepdims=True)
    return (x - mu) * lax.rsqrt(var + _LN_EPS) * w + b


def _erf(x):
    # Abramowitz & Stegun 7.1.26 rational approximation, |err| < 1.5e-7.
    a1, a2, a3, a4, a5 = 0.254829592, -0.284496736, 1.421413741, -1.453152027, 1.061405429
    p = 0.3275911
    ax = jnp.abs(x)
    t = 1.0 / (1.0 + p * ax)
    poly = ((((a5 * t + a4) * t + a3) * t + a2) * t + a1) * t
    y = 1.0 - poly * jnp.exp(-ax * ax)
    return jnp.where(x >= 0, y, -y)


def _gelu_exact(x):
    return 0.5 * x * (1.0 + _erf(x * 0.7071067811865476))


def _ceil_to(n, m):
    return ((n + m - 1) // m) * m


def _pick_tile(n, target, align):
    """Largest tile <= target that divides n and is `align`-aligned; else full n.
    d_ff / vocab are padded to 128-multiples at init, so the `return n` fallback
    only ever triggers for small dims (where a full-extent block is fine)."""
    if n <= target:
        return n
    t = (target // align) * align
    while t >= align:
        if n % t == 0:
            return t
        t -= align
    return n


# --------------------------------------------------------------------------- attention
def _attn_kernel(x_ref, ln1w_ref, ln1b_ref, wq_ref, wk_ref, wv_ref,
                 bq_ref, bk_ref, bv_ref, wo_ref, bo_ref, o_ref,
                 xn_s, k_s, v_s, acc_ref, *, tq, heads_per_group, head_dim):
    # grid = (B, q_tiles, head_groups); head-group axis is the innermost
    # reduction axis accumulated into acc_ref (f32, resident per (b, q) tile).
    q_idx = pl.program_id(1)
    g = pl.program_id(2)
    T = x_ref.shape[1]

    # Pre-LN over the full sequence: computed once per batch element and cached
    # in bf16 VMEM (reused by every (q-tile, head-group) step).
    @pl.when((q_idx == 0) & (g == 0))
    def _():
        x_full = x_ref[0].astype(jnp.float32)
        xn_s[...] = _layernorm(x_full, ln1w_ref[...], ln1b_ref[...]).astype(jnp.bfloat16)

    # K / V projections for this head group: wide (D, G*hd) matmuls, computed
    # once per batch element (q_idx == 0) and cached for all query tiles.
    @pl.when(q_idx == 0)
    def _():
        xn_full = xn_s[...]
        k_s[g] = (jnp.dot(xn_full, wk_ref[0], preferred_element_type=jnp.float32)
                  + bk_ref[0]).astype(jnp.bfloat16)
        v_s[g] = (jnp.dot(xn_full, wv_ref[0], preferred_element_type=jnp.float32)
                  + bv_ref[0]).astype(jnp.bfloat16)

    row0 = pl.multiple_of(q_idx * tq, tq)
    xn_q = xn_s[pl.ds(row0, tq), :]                                    # (tq, D) bf16

    # Residual init (accumulator holds x + sum_g ctx_g @ Wo_g).
    @pl.when(g == 0)
    def _():
        acc_ref[...] = x_ref[0, pl.ds(row0, tq), :].astype(jnp.float32)

    # Q projection (wide), with 1/sqrt(hd) folded into q.
    scale = jnp.float32(1.0 / math.sqrt(head_dim))
    qg = ((jnp.dot(xn_q, wq_ref[0], preferred_element_type=jnp.float32)
           + bq_ref[0]) * scale).astype(jnp.bfloat16)                  # (tq, G*hd)

    # Causal mask for this query tile (shared across heads in the group).
    rows = lax.broadcasted_iota(jnp.int32, (tq, T), 0) + q_idx * tq
    cols = lax.broadcasted_iota(jnp.int32, (tq, T), 1)
    causal = cols > rows                                               # (tq, T) bool

    kg = k_s[g]                                                        # (T, G*hd) bf16
    vg = v_s[g]
    ctx_heads = []
    for h in range(heads_per_group):                                   # static unroll
        lo = h * head_dim
        qh = qg[:, lo:lo + head_dim]                                   # (tq, hd)
        kh = kg[:, lo:lo + head_dim]                                   # (T, hd)
        vh = vg[:, lo:lo + head_dim]                                   # (T, hd)
        s = lax.dot_general(qh, kh, (((1,), (1,)), ((), ())),
                            preferred_element_type=jnp.float32)        # (tq, T)
        s = jnp.where(causal, jnp.float32(-1e30), s)
        s = s - jnp.max(s, axis=-1, keepdims=True)
        p = jnp.exp(s)
        denom = jnp.sum(p, axis=-1, keepdims=True)
        p = (p * pl.reciprocal(denom, approx=True)).astype(jnp.bfloat16)
        ctx_heads.append(jnp.dot(p, vh, preferred_element_type=jnp.float32))
    ctx = jnp.concatenate(ctx_heads, axis=-1).astype(jnp.bfloat16)     # (tq, G*hd)

    # Output projection: wide contracting dim (G*hd), accumulated in f32.
    acc_ref[...] += jnp.dot(ctx, wo_ref[0], preferred_element_type=jnp.float32)

    @pl.when(g == pl.num_programs(2) - 1)
    def _():
        o_ref[0] = (acc_ref[...] + bo_ref[...]).astype(o_ref.dtype)


def attention_layer(x, blk, *, tq, head_dim):
    B, T, D = x.shape
    n_groups, _, gw = blk['wq'].shape
    heads_per_group = gw // head_dim

    def const(shape):
        n = len(shape)
        return pl.BlockSpec(shape, lambda b, q, g, _n=n: (0,) * _n)

    def per_group(shape):
        n = len(shape) - 1
        return pl.BlockSpec((1,) + tuple(shape[1:]),
                            lambda b, q, g, _n=n: (g,) + (0,) * _n)

    kern = functools.partial(_attn_kernel, tq=tq,
                             heads_per_group=heads_per_group, head_dim=head_dim)
    return pl.pallas_call(
        kern,
        out_shape=jax.ShapeDtypeStruct((B, T, D), jnp.bfloat16),
        grid=(B, T // tq, n_groups),
        in_specs=[
            pl.BlockSpec((1, T, D), lambda b, q, g: (b, 0, 0)),        # x (full seq)
            const(blk['ln1_w'].shape), const(blk['ln1_b'].shape),
            per_group(blk['wq'].shape), per_group(blk['wk'].shape),
            per_group(blk['wv'].shape),
            per_group(blk['bq'].shape), per_group(blk['bk'].shape),
            per_group(blk['bv'].shape),
            per_group(blk['wo'].shape),
            const(blk['bo'].shape),
        ],
        out_specs=pl.BlockSpec((1, tq, D), lambda b, q, g: (b, q, 0)),
        scratch_shapes=[
            pltpu.VMEM((T, D), jnp.bfloat16),                 # cached LN(x)
            pltpu.VMEM((n_groups, T, gw), jnp.bfloat16),      # cached K
            pltpu.VMEM((n_groups, T, gw), jnp.bfloat16),      # cached V
            pltpu.VMEM((tq, D), jnp.float32),                 # out-proj accumulator
        ],
        # q axis must stay "arbitrary": the xn/K/V scratch fill is keyed on
        # q == 0 and would be skipped if megacore split the q axis.
        # TODO(synk): megacore over q tiles once flash-style KV tiling lands.
        compiler_params=pltpu.CompilerParams(
            dimension_semantics=("parallel", "arbitrary", "arbitrary"),
            vmem_limit_bytes=_CFG['vmem_limit']),
    )(x, blk['ln1_w'], blk['ln1_b'], blk['wq'], blk['wk'], blk['wv'],
      blk['bq'], blk['bk'], blk['bv'], blk['wo'], blk['bo'])


# --------------------------------------------------------------------------- MLP
def _mlp_kernel(x_ref, ln2w_ref, ln2b_ref, w1_ref, b1_ref, w2_ref, b2_ref,
                o_ref, xn_s, acc_ref):
    # grid = (row_tiles, ff_tiles); ff axis accumulated into acc_ref (f32).
    j = pl.program_id(1)

    @pl.when(j == 0)
    def _():
        x = x_ref[...].astype(jnp.float32)
        acc_ref[...] = x                                              # residual
        xn_s[...] = _layernorm(x, ln2w_ref[...], ln2b_ref[...]).astype(jnp.bfloat16)

    h1 = jnp.dot(xn_s[...], w1_ref[...], preferred_element_type=jnp.float32) + b1_ref[...]
    h1 = _gelu_exact(h1).astype(jnp.bfloat16)
    acc_ref[...] += jnp.dot(h1, w2_ref[...], preferred_element_type=jnp.float32)

    @pl.when(j == pl.num_programs(1) - 1)
    def _():
        o_ref[...] = (acc_ref[...] + b2_ref[...]).astype(o_ref.dtype)


def mlp_layer(x2d, blk, *, tm, tf):
    N, D = x2d.shape
    Dff = blk['w1'].shape[1]
    in_specs = [
        pl.BlockSpec((tm, D), lambda i, j: (i, 0)),
        pl.BlockSpec(blk['ln2_w'].shape, lambda i, j: (0, 0)),
        pl.BlockSpec(blk['ln2_b'].shape, lambda i, j: (0, 0)),
        pl.BlockSpec((D, tf), lambda i, j: (0, j)),
        pl.BlockSpec((1, tf), lambda i, j: (0, j)),
        pl.BlockSpec((tf, D), lambda i, j: (j, 0)),
        pl.BlockSpec(blk['b2'].shape, lambda i, j: (0, 0)),
    ]
    return pl.pallas_call(
        _mlp_kernel,
        out_shape=jax.ShapeDtypeStruct((N, D), jnp.bfloat16),
        grid=(N // tm, Dff // tf),
        in_specs=in_specs,
        out_specs=pl.BlockSpec((tm, D), lambda i, j: (i, 0)),
        scratch_shapes=[pltpu.VMEM((tm, D), jnp.bfloat16),    # cached LN(x)
                        pltpu.VMEM((tm, D), jnp.float32)],    # accumulator
        compiler_params=pltpu.CompilerParams(
            dimension_semantics=("parallel", "arbitrary"),
            vmem_limit_bytes=_CFG['vmem_limit']),
    )(x2d, blk['ln2_w'], blk['ln2_b'], blk['w1'], blk['b1'], blk['w2'], blk['b2'])


# --------------------------------------------------------------------------- final LN + LM head
def _lnf_kernel(x_ref, w_ref, b_ref, o_ref):
    x = x_ref[...].astype(jnp.float32)
    o_ref[...] = _layernorm(x, w_ref[...], b_ref[...]).astype(o_ref.dtype)


def final_layernorm(x2d, params, *, tm):
    N, D = x2d.shape
    return pl.pallas_call(
        _lnf_kernel,
        out_shape=jax.ShapeDtypeStruct((N, D), jnp.bfloat16),
        grid=(N // tm,),
        in_specs=[pl.BlockSpec((tm, D), lambda i: (i, 0)),
                  pl.BlockSpec(params['lnf_w'].shape, lambda i: (0, 0)),
                  pl.BlockSpec(params['lnf_b'].shape, lambda i: (0, 0))],
        out_specs=pl.BlockSpec((tm, D), lambda i: (i, 0)),
        compiler_params=pltpu.CompilerParams(
            dimension_semantics=("parallel",),
            vmem_limit_bytes=_CFG['vmem_limit']),
    )(x2d, params['lnf_w'], params['lnf_b'])


def _head_kernel(xn_ref, wh_ref, bh_ref, o_ref):
    o_ref[...] = (jnp.dot(xn_ref[...], wh_ref[...], preferred_element_type=jnp.float32)
                  + bh_ref[...]).astype(o_ref.dtype)


def lm_head(xn2d, params, *, tm, tn):
    # Grid: vocab tiles OUTER, row tiles INNER -> the (D, tn) weight slab keeps
    # the same block index across the whole row sweep and stays VMEM-resident;
    # only the much smaller (tm, D) activation tiles stream from HBM.
    N, D = xn2d.shape
    Vp = params['head_w'].shape[1]
    return pl.pallas_call(
        _head_kernel,
        out_shape=jax.ShapeDtypeStruct((N, Vp), jnp.float32),
        grid=(Vp // tn, N // tm),
        in_specs=[pl.BlockSpec((tm, D), lambda j, i: (i, 0)),
                  pl.BlockSpec((D, tn), lambda j, i: (0, j)),
                  pl.BlockSpec((1, tn), lambda j, i: (0, j))],
        out_specs=pl.BlockSpec((tm, tn), lambda j, i: (i, j)),
        compiler_params=pltpu.CompilerParams(
            dimension_semantics=("parallel", "parallel"),
            vmem_limit_bytes=_CFG['vmem_limit']),
    )(xn2d, params['head_w'], params['head_b'])


# --------------------------------------------------------------------------- forward
def gpt_forward(tokens, params):
    B, T = tokens.shape
    D = params['tok_emb'].shape[1]
    V = params['vocab_size']

    tok = jnp.take(params['tok_emb'], tokens, axis=0)                 # embedding gather
    x = (tok + params['pos_emb'][:, :T, :]).astype(jnp.bfloat16)
    # nn.Dropout(0.1): identity (eval semantics).

    N = B * T
    tq = _pick_tile(T, _CFG['tq_target'], 16)
    tm = _pick_tile(N, _CFG['tm_target'], 16)

    for blk in params['blocks']:
        x = attention_layer(x, blk, tq=tq, head_dim=params['head_dim'])
        tf = _pick_tile(blk['w1'].shape[1], _CFG['tf_target'], 128)
        x = mlp_layer(x.reshape(N, D), blk, tm=tm, tf=tf).reshape(B, T, D)

    xn = final_layernorm(x.reshape(N, D), params, tm=tm)
    Vp = params['head_w'].shape[1]
    tn = _pick_tile(Vp, _CFG['tn_target'], 128)
    logits = lm_head(xn, params, tm=tm, tn=tn).reshape(B, T, Vp)      # (B, T, Vp) f32
    if Vp != V:
        logits = logits[..., :V]                                      # drop vocab padding
    return logits


# --------------------------------------------------------------------------- params
def init_params(key, *, vocab_size, d_model, n_head, d_ff, n_layer, max_seq_len):
    std = 0.02
    hd = d_model // n_head

    # Head grouping: smallest divisor of n_head with >=256-wide projection slabs.
    grp = n_head
    for g in range(1, n_head + 1):
        if n_head % g == 0 and g * hd >= 256:
            grp = g
            break
    n_groups = n_head // grp
    gw = grp * hd

    # Pad d_ff / vocab to multiples of 128 so aligned tiles always exist.
    d_ff_p = _ceil_to(d_ff, 128) if d_ff > 128 else d_ff
    vocab_p = _ceil_to(vocab_size, 128) if vocab_size > 128 else vocab_size

    keys = jax.random.split(key, 2 + 6 * n_layer)
    ki = iter(keys)

    def nrm(shape, dtype=jnp.bfloat16):
        # Same N(0, 0.02) init distribution as the PyTorch module; weights are
        # generated directly in the contiguous (in, out) / per-group layout.
        return (std * jax.random.normal(next(ki), shape, dtype=jnp.float32)).astype(dtype)

    head_w = nrm((d_model, vocab_size))
    head_w = jnp.pad(head_w, ((0, 0), (0, vocab_p - vocab_size)))

    params = {
        'vocab_size': vocab_size,
        'head_dim': hd,
        'tok_emb': nrm((vocab_size, d_model), jnp.float32),
        'pos_emb': jnp.zeros((1, max_seq_len, d_model), jnp.float32),  # torch.zeros init
        'lnf_w': jnp.ones((1, d_model), jnp.float32),
        'lnf_b': jnp.zeros((1, d_model), jnp.float32),
        'head_w': head_w,                                              # (D, Vp) bf16
        'head_b': jnp.zeros((1, vocab_p), jnp.float32),
        'blocks': [],
    }
    for _ in range(n_layer):
        w1 = jnp.pad(nrm((d_model, d_ff)), ((0, 0), (0, d_ff_p - d_ff)))
        w2 = jnp.pad(nrm((d_ff, d_model)), ((0, d_ff_p - d_ff), (0, 0)))
        params['blocks'].append({
            'ln1_w': jnp.ones((1, d_model), jnp.float32),
            'ln1_b': jnp.zeros((1, d_model), jnp.float32),
            'wq': nrm((n_groups, d_model, gw)),                        # per-group (D, G*hd)
            'wk': nrm((n_groups, d_model, gw)),
            'wv': nrm((n_groups, d_model, gw)),
            'bq': jnp.zeros((n_groups, 1, gw), jnp.float32),
            'bk': jnp.zeros((n_groups, 1, gw), jnp.float32),
            'bv': jnp.zeros((n_groups, 1, gw), jnp.float32),
            'wo': nrm((n_groups, gw, d_model)),                        # per-group (G*hd, D)
            'bo': jnp.zeros((1, d_model), jnp.float32),
            'ln2_w': jnp.ones((1, d_model), jnp.float32),
            'ln2_b': jnp.zeros((1, d_model), jnp.float32),
            'w1': w1,                                                  # (D, d_ff_p) bf16
            'b1': jnp.zeros((1, d_ff_p), jnp.float32),
            'w2': w2,                                                  # (d_ff_p, D) bf16
            'b2': jnp.zeros((1, d_model), jnp.float32),
        })
    return params


if __name__ == "__main__":
    vocab_size, d_model, n_head, d_ff, n_layer, max_seq_len = 64, 32, 4, 64, 2, 16
    B, T = 2, 8
    key = jax.random.PRNGKey(0)
    pkey, tkey = jax.random.split(key)
    params = init_params(pkey, vocab_size=vocab_size, d_model=d_model,
                         n_head=n_head, d_ff=d_ff, n_layer=n_layer,
                         max_seq_len=max_seq_len)
    tokens = jax.random.randint(tkey, (B, T), 0, vocab_size, dtype=jnp.int32)

    logits = gpt_forward(tokens, params)
    jax.block_until_ready(logits)
    assert logits.shape == (B, T, vocab_size) and logits.dtype == jnp.float32
    print("KERNEL_OK")
</pallas_src>

<mosaic_0001>
module attributes {stable_mosaic.version = 11 : i64} {
  func.func @_attn_kernel(%arg0: i32, %arg1: i32, %arg2: i32, %arg3: memref<1x8x32xbf16, #tpu.memory_space<vmem>>, %arg4: memref<1x32xf32, #tpu.memory_space<vmem>>, %arg5: memref<1x32xf32, #tpu.memory_space<vmem>>, %arg6: memref<1x32x32xbf16, #tpu.memory_space<vmem>>, %arg7: memref<1x32x32xbf16, #tpu.memory_space<vmem>>, %arg8: memref<1x32x32xbf16, #tpu.memory_space<vmem>>, %arg9: memref<1x1x32xf32, #tpu.memory_space<vmem>>, %arg10: memref<1x1x32xf32, #tpu.memory_space<vmem>>, %arg11: memref<1x1x32xf32, #tpu.memory_space<vmem>>, %arg12: memref<1x32x32xbf16, #tpu.memory_space<vmem>>, %arg13: memref<1x32xf32, #tpu.memory_space<vmem>>, %arg14: memref<1x8x32xbf16, #tpu.memory_space<vmem>>, %arg15: memref<8x32xbf16, #tpu.memory_space<vmem>>, %arg16: memref<1x8x32xbf16, #tpu.memory_space<vmem>>, %arg17: memref<1x8x32xbf16, #tpu.memory_space<vmem>>, %arg18: memref<8x32xf32, #tpu.memory_space<vmem>>) attributes {dimension_semantics = [#tpu.dimension_semantics<parallel>, #tpu.dimension_semantics<arbitrary>, #tpu.dimension_semantics<arbitrary>], iteration_bounds = array<i64: 2, 1, 1>, scalar_prefetch = 0 : i64, scratch_operands = 4 : i64, tpu.core_type = #tpu.core_type<tc>, window_params = [{transform_indices = @transform_0, window_bounds = array<i64: 1, 8, 32>}, {pipeline_mode = #tpu.pipeline_mode<synchronous>, transform_indices = @transform_1, window_bounds = array<i64: 1, 32>}, {pipeline_mode = #tpu.pipeline_mode<synchronous>, transform_indices = @transform_2, window_bounds = array<i64: 1, 32>}, {transform_indices = @transform_3, window_bounds = array<i64: 1, 32, 32>}, {transform_indices = @transform_4, window_bounds = array<i64: 1, 32, 32>}, {transform_indices = @transform_5, window_bounds = array<i64: 1, 32, 32>}, {transform_indices = @transform_6, window_bounds = array<i64: 1, 1, 32>}, {transform_indices = @transform_7, window_bounds = array<i64: 1, 1, 32>}, {transform_indices = @transform_8, window_bounds = array<i64: 1, 1, 32>}, {transform_indices = @transform_9, window_bounds = array<i64: 1, 32, 32>}, {pipeline_mode = #tpu.pipeline_mode<synchronous>, transform_indices = @transform_10, window_bounds = array<i64: 1, 32>}, {transform_indices = @transform_11, window_bounds = array<i64: 1, 8, 32>}]} {
    %c0_i32 = arith.constant 0 : i32
    %0 = arith.cmpi eq, %arg1, %c0_i32 : i32
    %c0_i32_0 = arith.constant 0 : i32
    %1 = arith.cmpi eq, %arg2, %c0_i32_0 : i32
    %2 = arith.andi %0, %1 : i1
    %3 = arith.extui %2 : i1 to i32
    %c0_i32_1 = arith.constant 0 : i32
    %4 = arith.cmpi ne, %3, %c0_i32_1 : i32
    scf.if %4 {
      %c0_48 = arith.constant 0 : index
      %c0_49 = arith.constant 0 : index
      %c0_50 = arith.constant 0 : index
      %120 = vector.load %arg3[%c0_48, %c0_49, %c0_50] : memref<1x8x32xbf16, #tpu.memory_space<vmem>>, vector<1x8x32xbf16>
      %121 = vector.shape_cast %120 : vector<1x8x32xbf16> to vector<8x32xbf16>
      %122 = arith.extf %121 : vector<8x32xbf16> to vector<8x32xf32>
      %c0_51 = arith.constant 0 : index
      %c0_52 = arith.constant 0 : index
      %123 = vector.load %arg4[%c0_51, %c0_52] : memref<1x32xf32, #tpu.memory_space<vmem>>, vector<1x32xf32>
      %c0_53 = arith.constant 0 : index
      %c0_54 = arith.constant 0 : index
      %124 = vector.load %arg5[%c0_53, %c0_54] : memref<1x32xf32, #tpu.memory_space<vmem>>, vector<1x32xf32>
      %cst_55 = arith.constant dense<0.000000e+00> : vector<8xf32>
      %125 = vector.multi_reduction <add>, %122, %cst_55 [1] : vector<8x32xf32> to vector<8xf32>
      %126 = vector.shape_cast %125 : vector<8xf32> to vector<8x1xf32>
      %cst_56 = arith.constant 3.200000e+01 : f32
      %127 = vector.broadcast %cst_56 : f32 to vector<8x1xf32>
      %128 = arith.divf %126, %127 : vector<8x1xf32>
      %129 = vector.broadcast %128 : vector<8x1xf32> to vector<8x32xf32>
      %130 = arith.subf %122, %129 : vector<8x32xf32>
      %131 = arith.mulf %130, %130 : vector<8x32xf32>
      %cst_57 = arith.constant dense<0.000000e+00> : vector<8xf32>
      %132 = vector.multi_reduction <add>, %131, %cst_57 [1] : vector<8x32xf32> to vector<8xf32>
      %133 = vector.shape_cast %132 : vector<8xf32> to vector<8x1xf32>
      %cst_58 = arith.constant 3.200000e+01 : f32
      %134 = vector.broadcast %cst_58 : f32 to vector<8x1xf32>
      %135 = arith.divf %133, %134 : vector<8x1xf32>
      %136 = vector.broadcast %128 : vector<8x1xf32> to vector<8x32xf32>
      %137 = arith.subf %122, %136 : vector<8x32xf32>
      %cst_59 = arith.constant 9.99999974E-6 : f32
      %138 = vector.broadcast %cst_59 : f32 to vector<8x1xf32>
      %139 = arith.addf %135, %138 : vector<8x1xf32>
      %140 = math.rsqrt %139 : vector<8x1xf32>
      %141 = vector.broadcast %140 : vector<8x1xf32> to vector<8x32xf32>
      %142 = arith.mulf %137, %141 : vector<8x32xf32>
      %143 = vector.broadcast %123 : vector<1x32xf32> to vector<8x32xf32>
      %144 = arith.mulf %142, %143 : vector<8x32xf32>
      %145 = vector.broadcast %124 : vector<1x32xf32> to vector<8x32xf32>
      %146 = arith.addf %144, %145 : vector<8x32xf32>
      %147 = arith.truncf %146 : vector<8x32xf32> to vector<8x32xbf16>
      %c0_60 = arith.constant 0 : index
      %c0_61 = arith.constant 0 : index
      %148 = vector.load %arg15[%c0_60, %c0_61] : memref<8x32xbf16, #tpu.memory_space<vmem>>, vector<8x32xbf16>
      tpu.vector_store %arg15[%c0_60, %c0_61], %147 {strides = array<i32>} : memref<8x32xbf16, #tpu.memory_space<vmem>>, vector<8x32xbf16>,
    } else {
    }
    %c0_i32_2 = arith.constant 0 : i32
    %5 = arith.cmpi eq, %arg1, %c0_i32_2 : i32
    %6 = arith.extui %5 : i1 to i32
    %c0_i32_3 = arith.constant 0 : i32
    %7 = arith.cmpi ne, %6, %c0_i32_3 : i32
    scf.if %7 {
      %c0_48 = arith.constant 0 : index
      %c0_49 = arith.constant 0 : index
      %120 = vector.load %arg15[%c0_48, %c0_49] : memref<8x32xbf16, #tpu.memory_space<vmem>>, vector<8x32xbf16>
      %c0_50 = arith.constant 0 : index
      %c0_51 = arith.constant 0 : index
      %c0_52 = arith.constant 0 : index
      %121 = vector.load %arg7[%c0_50, %c0_51, %c0_52] : memref<1x32x32xbf16, #tpu.memory_space<vmem>>, vector<1x32x32xbf16>
      %122 = vector.shape_cast %121 : vector<1x32x32xbf16> to vector<32x32xbf16>
      %cst_53 = arith.constant dense<0.000000e+00> : vector<8x32xf32>
      %123 = tpu.matmul %120, %122, %cst_53 {dimension_numbers = #tpu.dot_dimension_numbers<[1], [0], [0], [1], [0, 0, 1, 1], [], []>} : vector<8x32xbf16>, vector<32x32xbf16>, vector<8x32xf32> -> vector<8x32xf32>
      %c0_54 = arith.constant 0 : index
      %c0_55 = arith.constant 0 : index
      %c0_56 = arith.constant 0 : index
      %124 = vector.load %arg10[%c0_54, %c0_55, %c0_56] : memref<1x1x32xf32, #tpu.memory_space<vmem>>, vector<1x1x32xf32>
      %125 = vector.shape_cast %124 : vector<1x1x32xf32> to vector<1x32xf32>
      %126 = vector.broadcast %125 : vector<1x32xf32> to vector<8x32xf32>
      %127 = arith.addf %123, %126 : vector<8x32xf32>
      %128 = arith.truncf %127 : vector<8x32xf32> to vector<8x32xbf16>
      %129 = arith.index_cast %arg2 : i32 to index
      %c0_57 = arith.constant 0 : index
      %c0_58 = arith.constant 0 : index
      %130 = vector.load %arg16[%129, %c0_57, %c0_58] : memref<1x8x32xbf16, #tpu.memory_space<vmem>>, vector<1x8x32xbf16>
      %131 = vector.shape_cast %130 : vector<1x8x32xbf16> to vector<8x32xbf16>
      %132 = vector.shape_cast %128 : vector<8x32xbf16> to vector<1x8x32xbf16>
      tpu.vector_store %arg16[%129, %c0_57, %c0_58], %132 {strides = array<i32>} : memref<1x8x32xbf16, #tpu.memory_space<vmem>>, vector<1x8x32xbf16>,
      %c0_59 = arith.constant 0 : index
      %c0_60 = arith.constant 0 : index
      %c0_61 = arith.constant 0 : index
      %133 = vector.load %arg8[%c0_59, %c0_60, %c0_61] : memref<1x32x32xbf16, #tpu.memory_space<vmem>>, vector<1x32x32xbf16>
      %134 = vector.shape_cast %133 : vector<1x32x32xbf16> to vector<32x32xbf16>
      %cst_62 = arith.constant dense<0.000000e+00> : vector<8x32xf32>
      %135 = tpu.matmul %120, %134, %cst_62 {dimension_numbers = #tpu.dot_dimension_numbers<[1], [0], [0], [1], [0, 0, 1, 1], [], []>} : vector<8x32xbf16>, vector<32x32xbf16>, vector<8x32xf32> -> vector<8x32xf32>
      %c0_63 = arith.constant 0 : index
      %c0_64 = arith.constant 0 : index
      %c0_65 = arith.constant 0 : index
      %136 = vector.load %arg11[%c0_63, %c0_64, %c0_65] : memref<1x1x32xf32, #tpu.memory_space<vmem>>, vector<1x1x32xf32>
      %137 = vector.shape_cast %136 : vector<1x1x32xf32> to vector<1x32xf32>
      %138 = vector.broadcast %137 : vector<1x32xf32> to vector<8x32xf32>
      %139 = arith.addf %135, %138 : vector<8x32xf32>
      %140 = arith.truncf %139 : vector<8x32xf32> to vector<8x32xbf16>
      %141 = arith.index_cast %arg2 : i32 to index
      %c0_66 = arith.constant 0 : index
      %c0_67 = arith.constant 0 : index
      %142 = vector.load %arg17[%141, %c0_66, %c0_67] : memref<1x8x32xbf16, #tpu.memory_space<vmem>>, vector<1x8x32xbf16>
      %143 = vector.shape_cast %142 : vector<1x8x32xbf16> to vector<8x32xbf16>
      %144 = vector.shape_cast %140 : vector<8x32xbf16> to vector<1x8x32xbf16>
      tpu.vector_store %arg17[%141, %c0_66, %c0_67], %144 {strides = array<i32>} : memref<1x8x32xbf16, #tpu.memory_space<vmem>>, vector<1x8x32xbf16>,
    } else {
    }
    %c8_i32 = arith.constant 8 : i32
    %8 = arith.muli %arg1, %c8_i32 : i32
    %9 = tpu.assume_multiple %8, 8 : i32
    %10 = arith.index_cast %9 : i32 to index
    %c0 = arith.constant 0 : index
    %11 = vector.load %arg15[%10, %c0] : memref<8x32xbf16, #tpu.memory_space<vmem>>, vector<8x32xbf16>
    %c0_i32_4 = arith.constant 0 : i32
    %12 = arith.cmpi eq, %arg2, %c0_i32_4 : i32
    %13 = arith.extui %12 : i1 to i32
    %c0_i32_5 = arith.constant 0 : i32
    %14 = arith.cmpi ne, %13, %c0_i32_5 : i32
    scf.if %14 {
      %c0_48 = arith.constant 0 : index
      %120 = arith.index_cast %9 : i32 to index
      %c0_49 = arith.constant 0 : index
      %121 = vector.load %arg3[%c0_48, %120, %c0_49] : memref<1x8x32xbf16, #tpu.memory_space<vmem>>, vector<1x8x32xbf16>
      %122 = vector.shape_cast %121 : vector<1x8x32xbf16> to vector<8x32xbf16>
      %123 = arith.extf %122 : vector<8x32xbf16> to vector<8x32xf32>
      %c0_50 = arith.constant 0 : index
      %c0_51 = arith.constant 0 : index
      %124 = vector.load %arg18[%c0_50, %c0_51] : memref<8x32xf32, #tpu.memory_space<vmem>>, vector<8x32xf32>
      tpu.vector_store %arg18[%c0_50, %c0_51], %123 {strides = array<i32>} : memref<8x32xf32, #tpu.memory_space<vmem>>, vector<8x32xf32>,
    } else {
    }
    %c0_6 = arith.constant 0 : index
    %c0_7 = arith.constant 0 : index
    %c0_8 = arith.constant 0 : index
    %15 = vector.load %arg6[%c0_6, %c0_7, %c0_8] : memref<1x32x32xbf16, #tpu.memory_space<vmem>>, vector<1x32x32xbf16>
    %16 = vector.shape_cast %15 : vector<1x32x32xbf16> to vector<32x32xbf16>
    %cst = arith.constant dense<0.000000e+00> : vector<8x32xf32>
    %17 = tpu.matmul %11, %16, %cst {dimension_numbers = #tpu.dot_dimension_numbers<[1], [0], [0], [1], [0, 0, 1, 1], [], []>} : vector<8x32xbf16>, vector<32x32xbf16>, vector<8x32xf32> -> vector<8x32xf32>
    %c0_9 = arith.constant 0 : index
    %c0_10 = arith.constant 0 : index
    %c0_11 = arith.constant 0 : index
    %18 = vector.load %arg9[%c0_9, %c0_10, %c0_11] : memref<1x1x32xf32, #tpu.memory_space<vmem>>, vector<1x1x32xf32>
    %19 = vector.shape_cast %18 : vector<1x1x32xf32> to vector<1x32xf32>
    %20 = vector.broadcast %19 : vector<1x32xf32> to vector<8x32xf32>
    %21 = arith.addf %17, %20 : vector<8x32xf32>
    %cst_12 = arith.constant 0.353553385 : f32
    %22 = vector.broadcast %cst_12 : f32 to vector<8x32xf32>
    %23 = arith.mulf %21, %22 : vector<8x32xf32>
    %24 = arith.truncf %23 : vector<8x32xf32> to vector<8x32xbf16>
    %25 = tpu.iota {dimensions = array<i32: 0>} : vector<8x8xi32>
    %c8_i32_13 = arith.constant 8 : i32
    %26 = arith.muli %arg1, %c8_i32_13 : i32
    %27 = vector.broadcast %26 : i32 to vector<8x8xi32>
    %28 = arith.addi %25, %27 : vector<8x8xi32>
    %29 = tpu.iota {dimensions = array<i32: 1>} : vector<8x8xi32>
    %30 = arith.cmpi sgt, %29, %28 : vector<8x8xi32>
    %31 = arith.index_cast %arg2 : i32 to index
    %c0_14 = arith.constant 0 : index
    %c0_15 = arith.constant 0 : index
    %32 = vector.load %arg16[%31, %c0_14, %c0_15] : memref<1x8x32xbf16, #tpu.memory_space<vmem>>, vector<1x8x32xbf16>
    %33 = vector.shape_cast %32 : vector<1x8x32xbf16> to vector<8x32xbf16>
    %34 = arith.index_cast %arg2 : i32 to index
    %c0_16 = arith.constant 0 : index
    %c0_17 = arith.constant 0 : index
    %35 = vector.load %arg17[%34, %c0_16, %c0_17] : memref<1x8x32xbf16, #tpu.memory_space<vmem>>, vector<1x8x32xbf16>
    %36 = vector.shape_cast %35 : vector<1x8x32xbf16> to vector<8x32xbf16>
    %37 = vector.extract_strided_slice %24 {offsets = [0, 0], sizes = [8, 8], strides = [1, 1]} : vector<8x32xbf16> to vector<8x8xbf16>
    %38 = vector.extract_strided_slice %33 {offsets = [0, 0], sizes = [8, 8], strides = [1, 1]} : vector<8x32xbf16> to vector<8x8xbf16>
    %39 = vector.extract_strided_slice %36 {offsets = [0, 0], sizes = [8, 8], strides = [1, 1]} : vector<8x32xbf16> to vector<8x8xbf16>
    %cst_18 = arith.constant dense<0.000000e+00> : vector<8x8xf32>
    %40 = tpu.matmul %37, %38, %cst_18 {dimension_numbers = #tpu.dot_dimension_numbers<[1], [1], [0], [0], [0, 0, 1, 0], [], []>} : vector<8x8xbf16>, vector<8x8xbf16>, vector<8x8xf32> -> vector<8x8xf32>
    %cst_19 = arith.constant -1.000000e+30 : f32
    %41 = vector.broadcast %cst_19 : f32 to vector<8x8xf32>
    %42 = arith.select %30, %41, %40 : vector<8x8xi1>, vector<8x8xf32>
    %cst_20 = arith.constant dense<0xFF800000> : vector<8xf32>
    %43 = vector.multi_reduction <maximumf>, %42, %cst_20 [1] : vector<8x8xf32> to vector<8xf32>
    %44 = vector.shape_cast %43 : vector<8xf32> to vector<8x1xf32>
    %45 = vector.broadcast %44 : vector<8x1xf32> to vector<8x8xf32>
    %46 = arith.subf %42, %45 : vector<8x8xf32>
    %47 = math.exp %46 : vector<8x8xf32>
    %cst_21 = arith.constant dense<0.000000e+00> : vector<8xf32>
    %48 = vector.multi_reduction <add>, %47, %cst_21 [1] : vector<8x8xf32> to vector<8xf32>
    %49 = vector.shape_cast %48 : vector<8xf32> to vector<8x1xf32>
    %50 = tpu.reciprocal %49 {approx = true} : vector<8x1xf32> -> vector<8x1xf32>
    %51 = vector.broadcast %50 : vector<8x1xf32> to vector<8x8xf32>
    %52 = arith.mulf %47, %51 : vector<8x8xf32>
    %53 = arith.truncf %52 : vector<8x8xf32> to vector<8x8xbf16>
    %cst_22 = arith.constant dense<0.000000e+00> : vector<8x8xf32>
    %54 = tpu.matmul %53, %39, %cst_22 {dimension_numbers = #tpu.dot_dimension_numbers<[1], [0], [0], [1], [0, 0, 1, 1], [], []>} : vector<8x8xbf16>, vector<8x8xbf16>, vector<8x8xf32> -> vector<8x8xf32>
    %55 = vector.extract_strided_slice %24 {offsets = [0, 8], sizes = [8, 8], strides = [1, 1]} : vector<8x32xbf16> to vector<8x8xbf16>
    %56 = vector.extract_strided_slice %33 {offsets = [0, 8], sizes = [8, 8], strides = [1, 1]} : vector<8x32xbf16> to vector<8x8xbf16>
    %57 = vector.extract_strided_slice %36 {offsets = [0, 8], sizes = [8, 8], strides = [1, 1]} : vector<8x32xbf16> to vector<8x8xbf16>
    %cst_23 = arith.constant dense<0.000000e+00> : vector<8x8xf32>
    %58 = tpu.matmul %55, %56, %cst_23 {dimension_numbers = #tpu.dot_dimension_numbers<[1], [1], [0], [0], [0, 0, 1, 0], [], []>} : vector<8x8xbf16>, vector<8x8xbf16>, vector<8x8xf32> -> vector<8x8xf32>
    %cst_24 = arith.constant -1.000000e+30 : f32
    %59 = vector.broadcast %cst_24 : f32 to vector<8x8xf32>
    %60 = arith.select %30, %59, %58 : vector<8x8xi1>, vector<8x8xf32>
    %cst_25 = arith.constant dense<0xFF800000> : vector<8xf32>
    %61 = vector.multi_reduction <maximumf>, %60, %cst_25 [1] : vector<8x8xf32> to vector<8xf32>
    %62 = vector.shape_cast %61 : vector<8xf32> to vector<8x1xf32>
    %63 = vector.broadcast %62 : vector<8x1xf32> to vector<8x8xf32>
    %64 = arith.subf %60, %63 : vector<8x8xf32>
    %65 = math.exp %64 : vector<8x8xf32>
    %cst_26 = arith.constant dense<0.000000e+00> : vector<8xf32>
    %66 = vector.multi_reduction <add>, %65, %cst_26 [1] : vector<8x8xf32> to vector<8xf32>
    %67 = vector.shape_cast %66 : vector<8xf32> to vector<8x1xf32>
    %68 = tpu.reciprocal %67 {approx = true} : vector<8x1xf32> -> vector<8x1xf32>
    %69 = vector.broadcast %68 : vector<8x1xf32> to vector<8x8xf32>
    %70 = arith.mulf %65, %69 : vector<8x8xf32>
    %71 = arith.truncf %70 : vector<8x8xf32> to vector<8x8xbf16>
    %cst_27 = arith.constant dense<0.000000e+00> : vector<8x8xf32>
    %72 = tpu.matmul %71, %57, %cst_27 {dimension_numbers = #tpu.dot_dimension_numbers<[1], [0], [0], [1], [0, 0, 1, 1], [], []>} : vector<8x8xbf16>, vector<8x8xbf16>, vector<8x8xf32> -> vector<8x8xf32>
    %73 = vector.extract_strided_slice %24 {offsets = [0, 16], sizes = [8, 8], strides = [1, 1]} : vector<8x32xbf16> to vector<8x8xbf16>
    %74 = vector.extract_strided_slice %33 {offsets = [0, 16], sizes = [8, 8], strides = [1, 1]} : vector<8x32xbf16> to vector<8x8xbf16>
    %75 = vector.extract_strided_slice %36 {offsets = [0, 16], sizes = [8, 8], strides = [1, 1]} : vector<8x32xbf16> to vector<8x8xbf16>
    %cst_28 = arith.constant dense<0.000000e+00> : vector<8x8xf32>
    %76 = tpu.matmul %73, %74, %cst_28 {dimension_numbers = #tpu.dot_dimension_numbers<[1], [1], [0], [0], [0, 0, 1, 0], [], []>} : vector<8x8xbf16>, vector<8x8xbf16>, vector<8x8xf32> -> vector<8x8xf32>
    %cst_29 = arith.constant -1.000000e+30 : f32
    %77 = vector.broadcast %cst_29 : f32 to vector<8x8xf32>
    %78 = arith.select %30, %77, %76 : vector<8x8xi1>, vector<8x8xf32>
    %cst_30 = arith.constant dense<0xFF800000> : vector<8xf32>
    %79 = vector.multi_reduction <maximumf>, %78, %cst_30 [1] : vector<8x8xf32> to vector<8xf32>
    %80 = vector.shape_cast %79 : vector<8xf32> to vector<8x1xf32>
    %81 = vector.broadcast %80 : vector<8x1xf32> to vector<8x8xf32>
    %82 = arith.subf %78, %81 : vector<8x8xf32>
    %83 = math.exp %82 : vector<8x8xf32>
    %cst_31 = arith.constant dense<0.000000e+00> : vector<8xf32>
    %84 = vector.multi_reduction <add>, %83, %cst_31 [1] : vector<8x8xf32> to vector<8xf32>
    %85 = vector.shape_cast %84 : vector<8xf32> to vector<8x1xf32>
    %86 = tpu.reciprocal %85 {approx = true} : vector<8x1xf32> -> vector<8x1xf32>
    %87 = vector.broadcast %86 : vector<8x1xf32> to vector<8x8xf32>
    %88 = arith.mulf %83, %87 : vector<8x8xf32>
    %89 = arith.truncf %88 : vector<8x8xf32> to vector<8x8xbf16>
    %cst_32 = arith.constant dense<0.000000e+00> : vector<8x8xf32>
    %90 = tpu.matmul %89, %75, %cst_32 {dimension_numbers = #tpu.dot_dimension_numbers<[1], [0], [0], [1], [0, 0, 1, 1], [], []>} : vector<8x8xbf16>, vector<8x8xbf16>, vector<8x8xf32> -> vector<8x8xf32>
    %91 = vector.extract_strided_slice %24 {offsets = [0, 24], sizes = [8, 8], strides = [1, 1]} : vector<8x32xbf16> to vector<8x8xbf16>
    %92 = vector.extract_strided_slice %33 {offsets = [0, 24], sizes = [8, 8], strides = [1, 1]} : vector<8x32xbf16> to vector<8x8xbf16>
    %93 = vector.extract_strided_slice %36 {offsets = [0, 24], sizes = [8, 8], strides = [1, 1]} : vector<8x32xbf16> to vector<8x8xbf16>
    %cst_33 = arith.constant dense<0.000000e+00> : vector<8x8xf32>
    %94 = tpu.matmul %91, %92, %cst_33 {dimension_numbers = #tpu.dot_dimension_numbers<[1], [1], [0], [0], [0, 0, 1, 0], [], []>} : vector<8x8xbf16>, vector<8x8xbf16>, vector<8x8xf32> -> vector<8x8xf32>
    %cst_34 = arith.constant -1.000000e+30 : f32
    %95 = vector.broadcast %cst_34 : f32 to vector<8x8xf32>
    %96 = arith.select %30, %95, %94 : vector<8x8xi1>, vector<8x8xf32>
    %cst_35 = arith.constant dense<0xFF800000> : vector<8xf32>
    %97 = vector.multi_reduction <maximumf>, %96, %cst_35 [1] : vector<8x8xf32> to vector<8xf32>
    %98 = vector.shape_cast %97 : vector<8xf32> to vector<8x1xf32>
    %99 = vector.broadcast %98 : vector<8x1xf32> to vector<8x8xf32>
    %100 = arith.subf %96, %99 : vector<8x8xf32>
    %101 = math.exp %100 : vector<8x8xf32>
    %cst_36 = arith.constant dense<0.000000e+00> : vector<8xf32>
    %102 = vector.multi_reduction <add>, %101, %cst_36 [1] : vector<8x8xf32> to vector<8xf32>
    %103 = vector.shape_cast %102 : vector<8xf32> to vector<8x1xf32>
    %104 = tpu.reciprocal %103 {approx = true} : vector<8x1xf32> -> vector<8x1xf32>
    %105 = vector.broadcast %104 : vector<8x1xf32> to vector<8x8xf32>
    %106 = arith.mulf %101, %105 : vector<8x8xf32>
    %107 = arith.truncf %106 : vector<8x8xf32> to vector<8x8xbf16>
    %cst_37 = arith.constant dense<0.000000e+00> : vector<8x8xf32>
    %108 = tpu.matmul %107, %93, %cst_37 {dimension_numbers = #tpu.dot_dimension_numbers<[1], [0], [0], [1], [0, 0, 1, 1], [], []>} : vector<8x8xbf16>, vector<8x8xbf16>, vector<8x8xf32> -> vector<8x8xf32>
    %109 = tpu.concatenate %54, %72, %90, %108 in 1 : vector<8x8xf32>, vector<8x8xf32>, vector<8x8xf32>, vector<8x8xf32> -> vector<8x32xf32>
    %110 = arith.truncf %109 : vector<8x32xf32> to vector<8x32xbf16>
    %c0_38 = arith.constant 0 : index
    %c0_39 = arith.constant 0 : index
    %111 = vector.load %arg18[%c0_38, %c0_39] : memref<8x32xf32, #tpu.memory_space<vmem>>, vector<8x32xf32>
    %c0_40 = arith.constant 0 : index
    %c0_41 = arith.constant 0 : index
    %c0_42 = arith.constant 0 : index
    %112 = vector.load %arg12[%c0_40, %c0_41, %c0_42] : memref<1x32x32xbf16, #tpu.memory_space<vmem>>, vector<1x32x32xbf16>
    %113 = vector.shape_cast %112 : vector<1x32x32xbf16> to vector<32x32xbf16>
    %cst_43 = arith.constant dense<0.000000e+00> : vector<8x32xf32>
    %114 = tpu.matmul %110, %113, %cst_43 {dimension_numbers = #tpu.dot_dimension_numbers<[1], [0], [0], [1], [0, 0, 1, 1], [], []>} : vector<8x32xbf16>, vector<32x32xbf16>, vector<8x32xf32> -> vector<8x32xf32>
    %115 = arith.addf %111, %114 : vector<8x32xf32>
    %c0_44 = arith.constant 0 : index
    %c0_45 = arith.constant 0 : index
    %116 = vector.load %arg18[%c0_44, %c0_45] : memref<8x32xf32, #tpu.memory_space<vmem>>, vector<8x32xf32>
    tpu.vector_store %arg18[%c0_44, %c0_45], %115 {strides = array<i32>} : memref<8x32xf32, #tpu.memory_space<vmem>>, vector<8x32xf32>,
    %c0_i32_46 = arith.constant 0 : i32
    %117 = arith.cmpi eq, %arg2, %c0_i32_46 : i32
    %118 = arith.extui %117 : i1 to i32
    %c0_i32_47 = arith.constant 0 : i32
    %119 = arith.cmpi ne, %118, %c0_i32_47 : i32
    scf.if %119 {
      %c0_48 = arith.constant 0 : index
      %c0_49 = arith.constant 0 : index
      %120 = vector.load %arg18[%c0_48, %c0_49] : memref<8x32xf32, #tpu.memory_space<vmem>>, vector<8x32xf32>
      %c0_50 = arith.constant 0 : index
      %c0_51 = arith.constant 0 : index
      %121 = vector.load %arg13[%c0_50, %c0_51] : memref<1x32xf32, #tpu.memory_space<vmem>>, vector<1x32xf32>
      %122 = vector.broadcast %121 : vector<1x32xf32> to vector<8x32xf32>
      %123 = arith.addf %120, %122 : vector<8x32xf32>
      %124 = arith.truncf %123 : vector<8x32xf32> to vector<8x32xbf16>
      %c0_52 = arith.constant 0 : index
      %c0_53 = arith.constant 0 : index
      %c0_54 = arith.constant 0 : index
      %125 = vector.load %arg14[%c0_52, %c0_53, %c0_54] : memref<1x8x32xbf16, #tpu.memory_space<vmem>>, vector<1x8x32xbf16>
      %126 = vector.shape_cast %125 : vector<1x8x32xbf16> to vector<8x32xbf16>
      %127 = vector.shape_cast %124 : vector<8x32xbf16> to vector<1x8x32xbf16>
      tpu.vector_store %arg14[%c0_52, %c0_53, %c0_54], %127 {strides = array<i32>} : memref<1x8x32xbf16, #tpu.memory_space<vmem>>, vector<1x8x32xbf16>,
    } else {
    }
    return
  }
  func.func @transform_0(%arg0: i32, %arg1: i32, %arg2: i32) -> (i32, i32, i32) {
    %c0_i32 = arith.constant 0 : i32
    %c0_i32_0 = arith.constant 0 : i32
    %c0_i32_1 = arith.constant 0 : i32
    return %arg0, %c0_i32, %c0_i32_0 : i32, i32, i32
  }
  func.func @transform_1(%arg0: i32, %arg1: i32, %arg2: i32) -> (i32, i32) {
    %c0_i32 = arith.constant 0 : i32
    %c0_i32_0 = arith.constant 0 : i32
    %c0_i32_1 = arith.constant 0 : i32
    return %c0_i32, %c0_i32_0 : i32, i32
  }
  func.func @transform_2(%arg0: i32, %arg1: i32, %arg2: i32) -> (i32, i32) {
    %c0_i32 = arith.constant 0 : i32
    %c0_i32_0 = arith.constant 0 : i32
    %c0_i32_1 = arith.constant 0 : i32
    return %c0_i32, %c0_i32_0 : i32, i32
  }
  func.func @transform_3(%arg0: i32, %arg1: i32, %arg2: i32) -> (i32, i32, i32) {
    %c0_i32 = arith.constant 0 : i32
    %c0_i32_0 = arith.constant 0 : i32
    %c0_i32_1 = arith.constant 0 : i32
    return %arg2, %c0_i32, %c0_i32_0 : i32, i32, i32
  }
  func.func @transform_4(%arg0: i32, %arg1: i32, %arg2: i32) -> (i32, i32, i32) {
    %c0_i32 = arith.constant 0 : i32
    %c0_i32_0 = arith.constant 0 : i32
    %c0_i32_1 = arith.constant 0 : i32
    return %arg2, %c0_i32, %c0_i32_0 : i32, i32, i32
  }
  func.func @transform_5(%arg0: i32, %arg1: i32, %arg2: i32) -> (i32, i32, i32) {
    %c0_i32 = arith.constant 0 : i32
    %c0_i32_0 = arith.constant 0 : i32
    %c0_i32_1 = arith.constant 0 : i32
    return %arg2, %c0_i32, %c0_i32_0 : i32, i32, i32
  }
  func.func @transform_6(%arg0: i32, %arg1: i32, %arg2: i32) -> (i32, i32, i32) {
    %c0_i32 = arith.constant 0 : i32
    %c0_i32_0 = arith.constant 0 : i32
    %c0_i32_1 = arith.constant 0 : i32
    return %arg2, %c0_i32, %c0_i32_0 : i32, i32, i32
  }
  func.func @transform_7(%arg0: i32, %arg1: i32, %arg2: i32) -> (i32, i32, i32) {
    %c0_i32 = arith.constant 0 : i32
    %c0_i32_0 = arith.constant 0 : i32
    %c0_i32_1 = arith.constant 0 : i32
    return %arg2, %c0_i32, %c0_i32_0 : i32, i32, i32
  }
  func.func @transform_8(%arg0: i32, %arg1: i32, %arg2: i32) -> (i32, i32, i32) {
    %c0_i32 = arith.constant 0 : i32
    %c0_i32_0 = arith.constant 0 : i32
    %c0_i32_1 = arith.constant 0 : i32
    return %arg2, %c0_i32, %c0_i32_0 : i32, i32, i32
  }
  func.func @transform_9(%arg0: i32, %arg1: i32, %arg2: i32) -> (i32, i32, i32) {
    %c0_i32 = arith.constant 0 : i32
    %c0_i32_0 = arith.constant 0 : i32
    %c0_i32_1 = arith.constant 0 : i32
    return %arg2, %c0_i32, %c0_i32_0 : i32, i32, i32
  }
  func.func @transform_10(%arg0: i32, %arg1: i32, %arg2: i32) -> (i32, i32) {
    %c0_i32 = arith.constant 0 : i32
    %c0_i32_0 = arith.constant 0 : i32
    %c0_i32_1 = arith.constant 0 : i32
    return %c0_i32, %c0_i32_0 : i32, i32
  }
  func.func @transform_11(%arg0: i32, %arg1: i32, %arg2: i32) -> (i32, i32, i32) {
    %c0_i32 = arith.constant 0 : i32
    %c0_i32_0 = arith.constant 0 : i32
    return %arg0, %arg1, %c0_i32 : i32, i32, i32
  }
}

</mosaic_0001>

<llo_original>
// kernel: tpu_custom_call.1
$region0: #{tpu_custom_call.1}
  #allocation0 [shape = 'u32[]', space=smem, size = 0x4, offset = 0x4, fixed_abs, tag = 'smem constant byte address 0x4 - core index']
  #allocation1 [shape = 'u32[144,128]{1,0:T(1,128)}', space=vmem, size = 0x12000, scoped, tag = 'internal scratch']
  #allocation2 [shape = 'bf16[8,32]{1,0:T(8,128)(2,1)}', space=vmem, size = 0x800, scoped, tag = 'scratch operand']
  #allocation3 [shape = 'bf16[1,8,32]{2,1,0:T(8,128)(2,1)}', space=vmem, size = 0x800, scoped, tag = 'scratch operand']
  #allocation4 [shape = 'bf16[1,8,32]{2,1,0:T(8,128)(2,1)}', space=vmem, size = 0x800, scoped, tag = 'scratch operand']
  #allocation5 [shape = 'f32[8,32]{1,0:T(8,128)}', space=vmem, size = 0x1000, scoped, tag = 'scratch operand']
  %s0 = inlined_call_operand.hbm [shape: bf16[2,8,32], index: 0, kind: input, shape index: {}]
  %s1 = inlined_call_operand.vmem [shape: f32[1,32], index: 1, kind: input, shape index: {}]
  %s2 = inlined_call_operand.vmem [shape: f32[1,32], index: 2, kind: input, shape index: {}]
  %s3 = inlined_call_operand.hbm [shape: bf16[1,32,32], index: 3, kind: input, shape index: {}]
  %s4 = inlined_call_operand.hbm [shape: bf16[1,32,32], index: 4, kind: input, shape index: {}]
  %s5 = inlined_call_operand.vmem [shape: bf16[1,32,32], index: 5, kind: input, shape index: {}]
  %s6 = inlined_call_operand.hbm [shape: f32[1,1,32], index: 6, kind: input, shape index: {}]
  %s7 = inlined_call_operand.hbm [shape: f32[1,1,32], index: 7, kind: input, shape index: {}]
  %s8 = inlined_call_operand.hbm [shape: f32[1,1,32], index: 8, kind: input, shape index: {}]
  %s9 = inlined_call_operand.vmem [shape: bf16[1,32,32], index: 9, kind: input, shape index: {}]
  %s10 = inlined_call_operand.vmem [shape: f32[1,32], index: 10, kind: input, shape index: {}]
  %s11 = inlined_call_operand.hbm [shape: bf16[2,8,32], index: 11, kind: output, shape index: {}]
  %s12 = sld [smem:[#allocation0]]
  $region117: #{tpu_custom_call.1} parent=0
    _
  %s14 = ssub.s32 1, %s12
  %s15 = scalar_select 0, %s14, %s12
  $region1: #{tpu_custom_call.1} parent=0
    #allocation6 [shape = 'u8[4096]{0}', space=vmem, size = 0x1000, scoped, tag = 'input window, operand 0']
    #allocation7 [shape = 's32[2]{0}', space=sflag, size = 0x8, scoped, tag = 'scoped memory for tpu_custom_call.1']
    #allocation8 [shape = 's32[2]{0}', space=sflag, size = 0x8, scoped, tag = 'scoped memory for tpu_custom_call.1']
    #allocation9 [shape = 'u8[8192]{0}', space=vmem, size = 0x2000, scoped, tag = 'input window, operand 3, single buffered']
    #allocation10 [shape = 's32[1]{0}', space=sflag, size = 0x4, scoped, tag = 'scoped memory for tpu_custom_call.1']
    #allocation11 [shape = 'u8[8192]{0}', space=vmem, size = 0x2000, scoped, tag = 'input window, operand 4, single buffered']
    #allocation12 [shape = 'u8[512]{0}', space=vmem, size = 0x400, scoped, tag = 'input window, operand 6, single buffered']
    #allocation13 [shape = 's32[1]{0}', space=sflag, size = 0x4, scoped, tag = 'scoped memory for tpu_custom_call.1']
    #allocation14 [shape = 'u8[512]{0}', space=vmem, size = 0x400, scoped, tag = 'input window, operand 7, single buffered']
    #allocation15 [shape = 'u8[512]{0}', space=vmem, size = 0x400, scoped, tag = 'input window, operand 8, single buffered']
    #allocation16 [shape = 's32[1]{0}', space=sflag, size = 0x4, scoped, tag = 'scoped memory for tpu_custom_call.1']
    #allocation17 [shape = 'u8[4096]{0}', space=vmem, size = 0x1000, scoped, tag = 'output window, operand 0']
    %16 = vsyncpa [#allocation7], 0
    %s17 = scalar_lea.sflag [#allocation7], 1
    %18 = vsyncpa %s17, 0
    %19 = vsyncpa [#allocation10], 0
    %20 = vsyncpa [#allocation13], 0
    %21 = vsyncpa [#allocation16], 0
    %22 = vsyncpa [#allocation8], 0
    %s23 = scalar_lea.sflag [#allocation8], 1
    %24 = vsyncpa %s23, 0
    loop: start=0, step=1, limit=4
    $region2: #{tpu_custom_call.1} parent=1 // loop_pre_header
      _
    $region3: #{tpu_custom_call.1} parent=1 // loop_header
      %s26 = sphi 0, %s30
      %p27 = scmp.ge.s32.totalorder %s26, 4
      %s33 = sphi 0, %s52
      %s34 = sphi 0, %s48
      %s35 = sphi 0, %s44
      %s36 = sphi 0, %s33
      %s37 = sphi 0, %s34
      %s38 = sphi 0, %s35
      %s39 = sphi 0, %s36
      %s40 = sphi 0, %s37
      %s41 = sphi 0, %s38
      %s55 = sphi 0, %s57
      %s58 = sphi 0, %s55
      %s59 = sphi 0, %s58
      %s75 = sphi 0, %s59
      %s79 = sphi 0, %s79
      %s81 = sphi 0, %s79
      %s82 = sphi 0, %s81
      %s96 = sphi 0, %s82
      %s100 = sphi 0, %s100
      %s102 = sphi 0, %s100
      %s103 = sphi 0, %s102
      %s117 = sphi 0, %s103
      %s123 = sphi 0, %s125
      %s126 = sphi 0, %s123
      %s127 = sphi 0, %s126
      %s143 = sphi 0, %s127
      %s149 = sphi 0, %s151
      %s152 = sphi 0, %s149
      %s153 = sphi 0, %s152
      %s169 = sphi 0, %s153
      %s175 = sphi 0, %s177
      %s178 = sphi 0, %s175
      %s179 = sphi 0, %s178
      %s195 = sphi 0, %s179
      %s201 = sphi 0, %s203
      %s204 = sphi 0, %s201
      %s205 = sphi 0, %s204
      %s221 = sphi 0, %s205
      %s227 = sphi 0, %s229
      %s230 = sphi 0, %s227
      %s231 = sphi 0, %s230
      %s247 = sphi 0, %s231
      %s253 = sphi 0, %s255
      %s256 = sphi 0, %s253
      %s257 = sphi 0, %s256
      %s273 = sphi 0, %s257
      %s279 = sphi 0, %s281
      %s282 = sphi 0, %s279
      %s283 = sphi 0, %s282
      %s299 = sphi 0, %s283
      %s303 = sphi 0, %s303
      %s305 = sphi 0, %s303
      %s306 = sphi 0, %s305
      %s320 = sphi 0, %s306
      %s328 = sphi 0, %s330
      %s331 = sphi 0, %s328
      %s332 = sphi 0, %s331
      %s348 = sphi 0, %s332
    $region4: #{tpu_custom_call.1} parent=1 // loop_header_branch
      %29 = sbr.rel (%p27) target = $region8
    $region5: #{tpu_custom_call.1} parent=1 // loop_body
      %s31 = ssub.s32 %s26, 1
      %s32 = ssub.s32 %s26, 2
      %s42 = sadd.s32 1, %s35
      %p43 = scmp.ge.s32.totalorder %s42, 1
      %s44 = scalar_select %p43, 0, %s42
      %s45 = sadd.s32 1, %s34
      %s46 = scalar_select %p43, %s45, %s34
      %p47 = scmp.ge.s32.totalorder %s46, 1
      %s48 = scalar_select %p47, 0, %s46
      %s49 = sadd.s32 1, %s33
      %s50 = scalar_select %p47, %s49, %s33
      %p51 = scmp.ge.s32.totalorder %s50, 2
      %s52 = scalar_select %p51, 0, %s50
      %s53 = ssub.s32 %s33, %s52
      %p54 = scmp.eq.s32.totalorder %s53, 0
      %s56 = sadd.s32 %s55, 1
      %s57 = scalar_select %p54, %s55, %s56
      %p60 = pneg %p54
      %p61 = scmp.eq.s32.totalorder %s26, 1
      %p62 = por %p60, %p61
      %p63 = scmp.ne.s32.totalorder %s55, %s58
      %p64 = scmp.eq.s32.totalorder %s26, 0
      %p65 = por %p63, %p64
      %p66 = scmp.ne.s32.totalorder %s55, %s58
      %p67 = scmp.eq.s32.totalorder %s31, 1
      %p68 = por %p66, %p67
      %p69 = scmp.ne.s32.totalorder %s58, %s59
      %p70 = scmp.eq.s32.totalorder %s31, 0
      %p71 = por %p69, %p70
      %p72 = scmp.ne.s32.totalorder %s58, %s59
      %p73 = scmp.eq.s32.totalorder %s32, 1
      %p74 = por %p72, %p73
      %p76 = scmp.ne.s32.totalorder %s59, %s75
      %p77 = scmp.eq.s32.totalorder %s32, 0
      %p78 = por %p76, %p77
      %s80 = sadd.s32 %s79, 1
      %p83 = scmp.eq.s32.totalorder %s26, 1
      %p84 = scmp.ne.s32.totalorder %s79, %s81
      %p85 = scmp.eq.s32.totalorder %s26, 0
      %p86 = por %p84, %p85
      %p87 = scmp.ne.s32.totalorder %s79, %s81
      %p88 = scmp.eq.s32.totalorder %s31, 1
      %p89 = por %p87, %p88
      %p90 = scmp.ne.s32.totalorder %s81, %s82
      %p91 = scmp.eq.s32.totalorder %s31, 0
      %p92 = por %p90, %p91
      %p93 = scmp.ne.s32.totalorder %s81, %s82
      %p94 = scmp.eq.s32.totalorder %s32, 1
      %p95 = por %p93, %p94
      %p97 = scmp.ne.s32.totalorder %s82, %s96
      %p98 = scmp.eq.s32.totalorder %s32, 0
      %p99 = por %p97, %p98
      %s101 = sadd.s32 %s100, 1
      %p104 = scmp.eq.s32.totalorder %s26, 1
      %p105 = scmp.ne.s32.totalorder %s100, %s102
      %p106 = scmp.eq.s32.totalorder %s26, 0
      %p107 = por %p105, %p106
      %p108 = scmp.ne.s32.totalorder %s100, %s102
      %p109 = scmp.eq.s32.totalorder %s31, 1
      %p110 = por %p108, %p109
      %p111 = scmp.ne.s32.totalorder %s102, %s103
      %p112 = scmp.eq.s32.totalorder %s31, 0
      %p113 = por %p111, %p112
      %p114 = scmp.ne.s32.totalorder %s102, %s103
      %p115 = scmp.eq.s32.totalorder %s32, 1
      %p116 = por %p114, %p115
      %p118 = scmp.ne.s32.totalorder %s103, %s117
      %p119 = scmp.eq.s32.totalorder %s32, 0
      %p120 = por %p118, %p119
      %s121 = ssub.s32 %s35, %s44
      %p122 = scmp.eq.s32.totalorder %s121, 0
      %s124 = sadd.s32 %s123, 1
      %s125 = scalar_select %p122, %s123, %s124
      %p128 = pneg %p122
      %p129 = scmp.eq.s32.totalorder %s26, 1
      %p130 = por %p128, %p129
      %p131 = scmp.ne.s32.totalorder %s123, %s126
      %p132 = scmp.eq.s32.totalorder %s26, 0
      %p133 = por %p131, %p132
      %p134 = scmp.ne.s32.totalorder %s123, %s126
      %p135 = scmp.eq.s32.totalorder %s31, 1
      %p136 = por %p134, %p135
      %p137 = scmp.ne.s32.totalorder %s126, %s127
      %p138 = scmp.eq.s32.totalorder %s31, 0
      %p139 = por %p137, %p138
      %p140 = scmp.ne.s32.totalorder %s126, %s127
      %p141 = scmp.eq.s32.totalorder %s32, 1
      %p142 = por %p140, %p141
      %p144 = scmp.ne.s32.totalorder %s127, %s143
      %p145 = scmp.eq.s32.totalorder %s32, 0
      %p146 = por %p144, %p145
      %s147 = ssub.s32 %s35, %s44
      %p148 = scmp.eq.s32.totalorder %s147, 0
      %s150 = sadd.s32 %s149, 1
      %s151 = scalar_select %p148, %s149, %s150
      %p154 = pneg %p148
      %p155 = scmp.eq.s32.totalorder %s26, 1
      %p156 = por %p154, %p155
      %p157 = scmp.ne.s32.totalorder %s149, %s152
      %p158 = scmp.eq.s32.totalorder %s26, 0
      %p159 = por %p157, %p158
      %p160 = scmp.ne.s32.totalorder %s149, %s152
      %p161 = scmp.eq.s32.totalorder %s31, 1
      %p162 = por %p160, %p161
      %p163 = scmp.ne.s32.totalorder %s152, %s153
      %p164 = scmp.eq.s32.totalorder %s31, 0
      %p165 = por %p163, %p164
      %p166 = scmp.ne.s32.totalorder %s152, %s153
      %p167 = scmp.eq.s32.totalorder %s32, 1
      %p168 = por %p166, %p167
      %p170 = scmp.ne.s32.totalorder %s153, %s169
      %p171 = scmp.eq.s32.totalorder %s32, 0
      %p172 = por %p170, %p171
      %s173 = ssub.s32 %s35, %s44
      %p174 = scmp.eq.s32.totalorder %s173, 0
      %s176 = sadd.s32 %s175, 1
      %s177 = scalar_select %p174, %s175, %s176
      %p180 = pneg %p174
      %p181 = scmp.eq.s32.totalorder %s26, 1
      %p182 = por %p180, %p181
      %p183 = scmp.ne.s32.totalorder %s175, %s178
      %p184 = scmp.eq.s32.totalorder %s26, 0
      %p185 = por %p183, %p184
      %p186 = scmp.ne.s32.totalorder %s175, %s178
      %p187 = scmp.eq.s32.totalorder %s31, 1
      %p188 = por %p186, %p187
      %p189 = scmp.ne.s32.totalorder %s178, %s179
      %p190 = scmp.eq.s32.totalorder %s31, 0
      %p191 = por %p189, %p190
      %p192 = scmp.ne.s32.totalorder %s178, %s179
      %p193 = scmp.eq.s32.totalorder %s32, 1
      %p194 = por %p192, %p193
      %p196 = scmp.ne.s32.totalorder %s179, %s195
      %p197 = scmp.eq.s32.totalorder %s32, 0
      %p198 = por %p196, %p197
      %s199 = ssub.s32 %s35, %s44
      %p200 = scmp.eq.s32.totalorder %s199, 0
      %s202 = sadd.s32 %s201, 1
      %s203 = scalar_select %p200, %s201, %s202
      %p206 = pneg %p200
      %p207 = scmp.eq.s32.totalorder %s26, 1
      %p208 = por %p206, %p207
      %p209 = scmp.ne.s32.totalorder %s201, %s204
      %p210 = scmp.eq.s32.totalorder %s26, 0
      %p211 = por %p209, %p210
      %p212 = scmp.ne.s32.totalorder %s201, %s204
      %p213 = scmp.eq.s32.totalorder %s31, 1
      %p214 = por %p212, %p213
      %p215 = scmp.ne.s32.totalorder %s204, %s205
      %p216 = scmp.eq.s32.totalorder %s31, 0
      %p217 = por %p215, %p216
      %p218 = scmp.ne.s32.totalorder %s204, %s205
      %p219 = scmp.eq.s32.totalorder %s32, 1
      %p220 = por %p218, %p219
      %p222 = scmp.ne.s32.totalorder %s205, %s221
      %p223 = scmp.eq.s32.totalorder %s32, 0
      %p224 = por %p222, %p223
      %s225 = ssub.s32 %s35, %s44
      %p226 = scmp.eq.s32.totalorder %s225, 0
      %s228 = sadd.s32 %s227, 1
      %s229 = scalar_select %p226, %s227, %s228
      %p232 = pneg %p226
      %p233 = scmp.eq.s32.totalorder %s26, 1
      %p234 = por %p232, %p233
      %p235 = scmp.ne.s32.totalorder %s227, %s230
      %p236 = scmp.eq.s32.totalorder %s26, 0
      %p237 = por %p235, %p236
      %p238 = scmp.ne.s32.totalorder %s227, %s230
      %p239 = scmp.eq.s32.totalorder %s31, 1
      %p240 = por %p238, %p239
      %p241 = scmp.ne.s32.totalorder %s230, %s231
      %p242 = scmp.eq.s32.totalorder %s31, 0
      %p243 = por %p241, %p242
      %p244 = scmp.ne.s32.totalorder %s230, %s231
      %p245 = scmp.eq.s32.totalorder %s32, 1
      %p246 = por %p244, %p245
      %p248 = scmp.ne.s32.totalorder %s231, %s247
      %p249 = scmp.eq.s32.totalorder %s32, 0
      %p250 = por %p248, %p249
      %s251 = ssub.s32 %s35, %s44
      %p252 = scmp.eq.s32.totalorder %s251, 0
      %s254 = sadd.s32 %s253, 1
      %s255 = scalar_select %p252, %s253, %s254
      %p258 = pneg %p252
      %p259 = scmp.eq.s32.totalorder %s26, 1
      %p260 = por %p258, %p259
      %p261 = scmp.ne.s32.totalorder %s253, %s256
      %p262 = scmp.eq.s32.totalorder %s26, 0
      %p263 = por %p261, %p262
      %p264 = scmp.ne.s32.totalorder %s253, %s256
      %p265 = scmp.eq.s32.totalorder %s31, 1
      %p266 = por %p264, %p265
      %p267 = scmp.ne.s32.totalorder %s256, %s257
      %p268 = scmp.eq.s32.totalorder %s31, 0
      %p269 = por %p267, %p268
      %p270 = scmp.ne.s32.totalorder %s256, %s257
      %p271 = scmp.eq.s32.totalorder %s32, 1
      %p272 = por %p270, %p271
      %p274 = scmp.ne.s32.totalorder %s257, %s273
      %p275 = scmp.eq.s32.totalorder %s32, 0
      %p276 = por %p274, %p275
      %s277 = ssub.s32 %s35, %s44
      %p278 = scmp.eq.s32.totalorder %s277, 0
      %s280 = sadd.s32 %s279, 1
      %s281 = scalar_select %p278, %s279, %s280
      %p284 = pneg %p278
      %p285 = scmp.eq.s32.totalorder %s26, 1
      %p286 = por %p284, %p285
      %p287 = scmp.ne.s32.totalorder %s279, %s282
      %p288 = scmp.eq.s32.totalorder %s26, 0
      %p289 = por %p287, %p288
      %p290 = scmp.ne.s32.totalorder %s279, %s282
      %p291 = scmp.eq.s32.totalorder %s31, 1
      %p292 = por %p290, %p291
      %p293 = scmp.ne.s32.totalorder %s282, %s283
      %p294 = scmp.eq.s32.totalorder %s31, 0
      %p295 = por %p293, %p294
      %p296 = scmp.ne.s32.totalorder %s282, %s283
      %p297 = scmp.eq.s32.totalorder %s32, 1
      %p298 = por %p296, %p297
      %p300 = scmp.ne.s32.totalorder %s283, %s299
      %p301 = scmp.eq.s32.totalorder %s32, 0
      %p302 = por %p300, %p301
      %s304 = sadd.s32 %s303, 1
      %p307 = scmp.eq.s32.totalorder %s26, 1
      %p308 = scmp.ne.s32.totalorder %s303, %s305
      %p309 = scmp.eq.s32.totalorder %s26, 0
      %p310 = por %p308, %p309
      %p311 = scmp.ne.s32.totalorder %s303, %s305
      %p312 = scmp.eq.s32.totalorder %s31, 1
      %p313 = por %p311, %p312
      %p314 = scmp.ne.s32.totalorder %s305, %s306
      %p315 = scmp.eq.s32.totalorder %s31, 0
      %p316 = por %p314, %p315
      %p317 = scmp.ne.s32.totalorder %s305, %s306
      %p318 = scmp.eq.s32.totalorder %s32, 1
      %p319 = por %p317, %p318
      %p321 = scmp.ne.s32.totalorder %s306, %s320
      %p322 = scmp.eq.s32.totalorder %s32, 0
      %p323 = por %p321, %p322
      %s324 = ssub.s32 %s33, %s52
      %s325 = ssub.s32 %s34, %s48
      %s326 = sor.u32 %s324, %s325
      %p327 = scmp.eq.s32.totalorder %s326, 0
      %s329 = sadd.s32 %s328, 1
      %s330 = scalar_select %p327, %s328, %s329
      %p333 = pneg %p327
      %p334 = scmp.eq.s32.totalorder %s26, 1
      %p335 = por %p333, %p334
      %p336 = scmp.ne.s32.totalorder %s328, %s331
      %p337 = scmp.eq.s32.totalorder %s26, 0
      %p338 = por %p336, %p337
      %p339 = scmp.ne.s32.totalorder %s328, %s331
      %p340 = scmp.eq.s32.totalorder %s31, 1
      %p341 = por %p339, %p340
      %p342 = scmp.ne.s32.totalorder %s331, %s332
      %p343 = scmp.eq.s32.totalorder %s31, 0
      %p344 = por %p342, %p343
      %p345 = scmp.ne.s32.totalorder %s331, %s332
      %p346 = scmp.eq.s32.totalorder %s32, 1
      %p347 = por %p345, %p346
      %p349 = scmp.ne.s32.totalorder %s332, %s348
      %p350 = scmp.eq.s32.totalorder %s32, 0
      %p351 = por %p349, %p350
      %p352 = scmp.le.s32.totalorder 1, %s26
      %p353 = scmp.lt.s32.totalorder %s26, 3
      %p354 = pnand %p352, %p353
      %p355 = pneg %p354
      // Predicated region
      $region9: #{tpu_custom_call.1} parent=5 // pred_check
        _
      $region10: #{tpu_custom_call.1} parent=5 // pred_check_branch
        %357 = sbr.rel (%p354) target = $region12
      $region11: #{tpu_custom_call.1} parent=5 // pred_region
        %s358 = ssub.s32 %s26, 1
        // Predicated region
        $region13: #{tpu_custom_call.1} parent=11 // pred_check
          %p359 = pneg %p92
        $region14: #{tpu_custom_call.1} parent=11 // pred_check_branch
          %361 = sbr.rel (%p359) target = $region16
        $region15: #{tpu_custom_call.1} parent=11 // pred_region
          _
        $region16: #{tpu_custom_call.1} parent=11 // pred_fallthru
          _
        // Predicated region
        $region17: #{tpu_custom_call.1} parent=11 // pred_check
          %p362 = pneg %p113
        $region18: #{tpu_custom_call.1} parent=11 // pred_check_branch
          %364 = sbr.rel (%p362) target = $region20
        $region19: #{tpu_custom_call.1} parent=11 // pred_region
          _
        $region20: #{tpu_custom_call.1} parent=11 // pred_fallthru
          _
        // Predicated region
        $region21: #{tpu_custom_call.1} parent=11 // pred_check
          %p365 = pneg %p139
        $region22: #{tpu_custom_call.1} parent=11 // pred_check_branch
          %367 = sbr.rel (%p365) target = $region24
        $region23: #{tpu_custom_call.1} parent=11 // pred_region
          %s369 = ssub.s32 256, 256
          %370 = vsyncadd [#allocation10], %s369
          %s371 = smul.addr %s38, 4
          %s372 = smul.addr %s371, 64
          %s373 = scalar_lea.hbm %s3, %s372
          %s374 = sshll.u32 [#allocation9], 4
          %s375 = int_to_ptr.vmem [resolvable:$true] %s374
          %380 = dma.hbm_to_vmem [thread:$0]  %s373, 256, %s375, [#allocation10], 64, 64, 4
        $region24: #{tpu_custom_call.1} parent=11 // pred_fallthru
          _
        // Predicated region
        $region25: #{tpu_custom_call.1} parent=11 // pred_check
          %p381 = pneg %p165
        $region26: #{tpu_custom_call.1} parent=11 // pred_check_branch
          %383 = sbr.rel (%p381) target = $region28
        $region27: #{tpu_custom_call.1} parent=11 // pred_region
          %s385 = ssub.s32 256, 256
          %386 = vsyncadd [#allocation10], %s385
          %s387 = smul.addr %s38, 4
          %s388 = smul.addr %s387, 64
          %s389 = scalar_lea.hbm %s4, %s388
          %s390 = sshll.u32 [#allocation11], 4
          %s391 = int_to_ptr.vmem [resolvable:$true] %s390
          %396 = dma.hbm_to_vmem [thread:$0]  %s389, 256, %s391, [#allocation10], 64, 64, 4
        $region28: #{tpu_custom_call.1} parent=11 // pred_fallthru
          _
        // Predicated region
        $region29: #{tpu_custom_call.1} parent=11 // pred_check
          %p397 = pneg %p191
        $region30: #{tpu_custom_call.1} parent=11 // pred_check_branch
          %399 = sbr.rel (%p397) target = $region32
        $region31: #{tpu_custom_call.1} parent=11 // pred_region
          %p400 = scmp.lt.s32.totalorder %s38, 0
          %s401 = scalar_select %p400, %s38, 0
          %s402 = smul.addr %s401, 4
          %s403 = smul.addr %s402, 4
          %s404 = scalar_lea.vmem %s5, %s403
        $region32: #{tpu_custom_call.1} parent=11 // pred_fallthru
          _
        // Predicated region
        $region33: #{tpu_custom_call.1} parent=11 // pred_check
          %p405 = pneg %p217
        $region34: #{tpu_custom_call.1} parent=11 // pred_check_branch
          %407 = sbr.rel (%p405) target = $region36
        $region35: #{tpu_custom_call.1} parent=11 // pred_region
          %s409 = ssub.s32 16, 16
          %410 = vsyncadd [#allocation13], %s409
          %s411 = smul.addr %s38, 16
          %s412 = scalar_lea.hbm %s6, %s411
          %s414 = sshll.u32 [#allocation12], 4
          %s415 = int_to_ptr.vmem [resolvable:$true] %s414
          %417 = dma.hbm_to_vmem [thread:$0]  %s412, 16, %s415, [#allocation13]
        $region36: #{tpu_custom_call.1} parent=11 // pred_fallthru
          _
        // Predicated region
        $region37: #{tpu_custom_call.1} parent=11 // pred_check
          %p418 = pneg %p243
        $region38: #{tpu_custom_call.1} parent=11 // pred_check_branch
          %420 = sbr.rel (%p418) target = $region40
        $region39: #{tpu_custom_call.1} parent=11 // pred_region
          %s422 = ssub.s32 16, 16
          %423 = vsyncadd [#allocation13], %s422
          %s424 = smul.addr %s38, 16
          %s425 = scalar_lea.hbm %s7, %s424
          %s427 = sshll.u32 [#allocation14], 4
          %s428 = int_to_ptr.vmem [resolvable:$true] %s427
          %430 = dma.hbm_to_vmem [thread:$0]  %s425, 16, %s428, [#allocation13]
        $region40: #{tpu_custom_call.1} parent=11 // pred_fallthru
          _
        // Predicated region
        $region41: #{tpu_custom_call.1} parent=11 // pred_check
          %p431 = pneg %p269
        $region42: #{tpu_custom_call.1} parent=11 // pred_check_branch
          %433 = sbr.rel (%p431) target = $region44
        $region43: #{tpu_custom_call.1} parent=11 // pred_region
          %s435 = ssub.s32 16, 16
          %436 = vsyncadd [#allocation16], %s435
          %s437 = smul.addr %s38, 16
          %s438 = scalar_lea.hbm %s8, %s437
          %s440 = sshll.u32 [#allocation15], 4
          %s441 = int_to_ptr.vmem [resolvable:$true] %s440
          %443 = dma.hbm_to_vmem [thread:$0]  %s438, 16, %s441, [#allocation16]
        $region44: #{tpu_custom_call.1} parent=11 // pred_fallthru
          _
        // Predicated region
        $region45: #{tpu_custom_call.1} parent=11 // pred_check
          %p444 = pneg %p295
        $region46: #{tpu_custom_call.1} parent=11 // pred_check_branch
          %446 = sbr.rel (%p444) target = $region48
        $region47: #{tpu_custom_call.1} parent=11 // pred_region
          %p447 = scmp.lt.s32.totalorder %s38, 0
          %s448 = scalar_select %p447, %s38, 0
          %s449 = smul.addr %s448, 4
          %s450 = smul.addr %s449, 4
          %s451 = scalar_lea.vmem %s9, %s450
        $region48: #{tpu_custom_call.1} parent=11 // pred_fallthru
          _
        // Predicated region
        $region49: #{tpu_custom_call.1} parent=11 // pred_check
          %p452 = pneg %p316
        $region50: #{tpu_custom_call.1} parent=11 // pred_check_branch
          %454 = sbr.rel (%p452) target = $region52
        $region51: #{tpu_custom_call.1} parent=11 // pred_region
          _
        $region52: #{tpu_custom_call.1} parent=11 // pred_fallthru
          _
      $region12: #{tpu_custom_call.1} parent=5 // pred_fallthru
        _
      %p455 = scmp.lt.s32.totalorder %s26, 2
      // Predicated region
      $region53: #{tpu_custom_call.1} parent=5 // pred_check
        %p456 = pneg %p455
      $region54: #{tpu_custom_call.1} parent=5 // pred_check_branch
        %458 = sbr.rel (%p456) target = $region56
      $region55: #{tpu_custom_call.1} parent=5 // pred_region
        // Predicated region
        $region57: #{tpu_custom_call.1} parent=55 // pred_check
          %p459 = pneg %p65
        $region58: #{tpu_custom_call.1} parent=55 // pred_check_branch
          %461 = sbr.rel (%p459) target = $region60
        $region59: #{tpu_custom_call.1} parent=55 // pred_region
          %s462 = sand.u32 %s55, 1
          %s463 = scalar_lea.sflag [#allocation7], %s462
          %s464 = sand.u32 %s55, 1
          %s465 = smul.addr %s464, 4
          %s466 = scalar_lea.vmem [#allocation6], %s465
          %s468 = ssub.s32 64, 64
          %469 = vsyncadd %s463, %s468
          %s470 = smul.addr %s33, 64
          %s471 = scalar_lea.hbm %s0, %s470
          %s473 = sshll.u32 %s466, 4
          %s474 = int_to_ptr.vmem [resolvable:$true] %s473
          %476 = dma.hbm_to_vmem [thread:$0]  %s471, 64, %s474, %s463
        $region60: #{tpu_custom_call.1} parent=55 // pred_fallthru
          _
      $region56: #{tpu_custom_call.1} parent=5 // pred_fallthru
        _
      %p477 = scmp.le.s32.totalorder 1, %s26
      %p478 = scmp.lt.s32.totalorder %s26, 3
      %p479 = pnand %p477, %p478
      %p480 = pneg %p479
      // Predicated region
      $region61: #{tpu_custom_call.1} parent=5 // pred_check
        _
      $region62: #{tpu_custom_call.1} parent=5 // pred_check_branch
        %482 = sbr.rel (%p479) target = $region64
      $region63: #{tpu_custom_call.1} parent=5 // pred_region
        %s483 = ssub.s32 %s26, 1
        %s484 = sand.u32 %s58, 1
        %s485 = scalar_lea.sflag [#allocation7], %s484
        %s486 = sand.u32 %s58, 1
        %s487 = smul.addr %s486, 4
        %s488 = scalar_lea.vmem [#allocation6], %s487
        // Predicated region
        $region65: #{tpu_custom_call.1} parent=63 // pred_check
          %p489 = pneg %p71
        $region66: #{tpu_custom_call.1} parent=63 // pred_check_branch
          %491 = sbr.rel (%p489) target = $region68
        $region67: #{tpu_custom_call.1} parent=63 // pred_region
          %492 = dma.done %s485, 64
        $region68: #{tpu_custom_call.1} parent=63 // pred_fallthru
          _
        // Predicated region
        $region69: #{tpu_custom_call.1} parent=63 // pred_check
          %p493 = pneg %p139
        $region70: #{tpu_custom_call.1} parent=63 // pred_check_branch
          %495 = sbr.rel (%p493) target = $region72
        $region71: #{tpu_custom_call.1} parent=63 // pred_region
          %496 = dma.done [#allocation10], 256
        $region72: #{tpu_custom_call.1} parent=63 // pred_fallthru
          _
        // Predicated region
        $region73: #{tpu_custom_call.1} parent=63 // pred_check
          %p497 = pneg %p165
        $region74: #{tpu_custom_call.1} parent=63 // pred_check_branch
          %499 = sbr.rel (%p497) target = $region76
        $region75: #{tpu_custom_call.1} parent=63 // pred_region
          %500 = dma.done [#allocation10], 256
        $region76: #{tpu_custom_call.1} parent=63 // pred_fallthru
          _
        // Predicated region
        $region77: #{tpu_custom_call.1} parent=63 // pred_check
          %p501 = pneg %p217
        $region78: #{tpu_custom_call.1} parent=63 // pred_check_branch
          %503 = sbr.rel (%p501) target = $region80
        $region79: #{tpu_custom_call.1} parent=63 // pred_region
          %504 = dma.done [#allocation13], 16
        $region80: #{tpu_custom_call.1} parent=63 // pred_fallthru
          _
        // Predicated region
        $region81: #{tpu_custom_call.1} parent=63 // pred_check
          %p505 = pneg %p243
        $region82: #{tpu_custom_call.1} parent=63 // pred_check_branch
          %507 = sbr.rel (%p505) target = $region84
        $region83: #{tpu_custom_call.1} parent=63 // pred_region
          %508 = dma.done [#allocation13], 16
        $region84: #{tpu_custom_call.1} parent=63 // pred_fallthru
          _
        // Predicated region
        $region85: #{tpu_custom_call.1} parent=63 // pred_check
          %p509 = pneg %p269
        $region86: #{tpu_custom_call.1} parent=63 // pred_check_branch
          %511 = sbr.rel (%p509) target = $region88
        $region87: #{tpu_custom_call.1} parent=63 // pred_region
          %512 = dma.done [#allocation16], 16
        $region88: #{tpu_custom_call.1} parent=63 // pred_fallthru
          _
        %s513 = sand.u32 %s58, 1
        %s514 = scalar_lea.sflag [#allocation7], %s513
        %s515 = sand.u32 %s58, 1
        %s516 = smul.addr %s515, 4
        %s517 = scalar_lea.vmem [#allocation6], %s516
        %p518 = pneg %p71
        %p519 = pneg %p68
        %p520 = pneg %p92
        %p521 = pneg %p89
        %p522 = pneg %p113
        %p523 = pneg %p110
        %p524 = pneg %p139
        %p525 = pneg %p136
        %p526 = pneg %p165
        %p527 = pneg %p162
        %p528 = scmp.lt.s32.totalorder %s38, 0
        %s529 = scalar_select %p528, %s38, 0
        %s530 = smul.addr %s529, 4
        %s531 = smul.addr %s530, 4
        %s532 = scalar_lea.vmem %s5, %s531
        %p533 = pneg %p191
        %p534 = pneg %p188
        %p535 = pneg %p217
        %p536 = pneg %p214
        %p537 = pneg %p243
        %p538 = pneg %p240
        %p539 = pneg %p269
        %p540 = pneg %p266
        %p541 = scmp.lt.s32.totalorder %s38, 0
        %s542 = scalar_select %p541, %s38, 0
        %s543 = smul.addr %s542, 4
        %s544 = smul.addr %s543, 4
        %s545 = scalar_lea.vmem %s9, %s544
        %p546 = pneg %p295
        %p547 = pneg %p292
        %p548 = pneg %p316
        %p549 = pneg %p313
        %p550 = pneg %p344
        %p551 = pneg %p341
        %s552 = sand.u32 %s331, 1
        %s553 = scalar_lea.sflag [#allocation8], %s552
        %s554 = sand.u32 %s331, 1
        %s555 = smul.addr %s554, 4
        %s556 = scalar_lea.vmem [#allocation17], %s555
        %p557 = scmp.lt.s32.totalorder %s38, 0
        %s558 = scalar_select %p557, %s38, 0
        %s559 = smul.addr %s558, 4
        %s560 = smul.addr %s559, 4
        %s561 = scalar_lea.vmem %s5, %s560
        %p562 = scmp.lt.s32.totalorder %s38, 0
        %s563 = scalar_select %p562, %s38, 0
        %s564 = smul.addr %s563, 4
        %s565 = smul.addr %s564, 4
        %s566 = scalar_lea.vmem %s9, %s565
        %p568 = scmp.eq.s32.totalorder %s37, 0
        %p569 = scmp.eq.s32.totalorder %s38, 0
        %p570 = pnand %p568, %p569
        %p571 = pneg %p570
        // Predicated region
        $region89: #{tpu_custom_call.1} parent=63 // pred_check
          _
        $region90: #{tpu_custom_call.1} parent=63 // pred_check_branch
          %573 = sbr.rel (%p570) target = $region92
        $region91: #{tpu_custom_call.1} parent=63 // pred_region
          %v574 = vld [vmem:[%s488] sm:$0xf]
          %v575 = vunpack.c.l.bf16 %v574
          %v576 = vld [vmem:[%s1] sm:$0x1]
          %v577 = vld [vmem:[%s2] sm:$0x1]
          %vm578 = vcmask 261120
          %v579 = vsel %vm578, %v575, 0.0
          %580 = vadd.xlane.f32.xlu0 %v579
          %v581 = vpop.xlane.xlu0 %580
          %v582 = vrcp.pop 32.0
          %v583 = vmul.f32 %v581, %v582
          %v584 = vsub.f32 %v575, %v583
          %v585 = vmul.f32 %v584, %v584
          %v586 = vsel %vm578, %v585, 0.0
          %587 = vadd.xlane.f32.xlu0 %v586
          %v588 = vpop.xlane.xlu0 %587
          %v589 = vmul.f32 %v588, %v582
          %v590 = vadd.f32 %v589, 1e-05
          %v591 = vrsqrt.pop %v590
          %v592 = vmul.f32 %v584, %v591
          %v594 = vlaneseq
          %v595 = vshrl.u32 %v594, 7
          %v596 = vsub.s32 0, %v595
          %v597 = vrot.slane %v576, %v596
          %v599 = vmul.f32 %v592, %v597
          %v601 = vlaneseq
          %v602 = vshrl.u32 %v601, 7
          %v603 = vsub.s32 0, %v602
          %v604 = vrot.slane %v577, %v603
          %v606 = vadd.f32 %v599, %v604
          %v607 = vpack.c.bf16 %v606, %v606
          %vm608 = vcmask 257024
          %609 = vst.msk [vmem:[#allocation2] sm:$0xf] %vm608, %v607
        $region92: #{tpu_custom_call.1} parent=63 // pred_fallthru
          _
        // Predicated region
        $region93: #{tpu_custom_call.1} parent=63 // pred_check
          %p610 = pneg %p568
        $region94: #{tpu_custom_call.1} parent=63 // pred_check_branch
          %612 = sbr.rel (%p610) target = $region96
        $region95: #{tpu_custom_call.1} parent=63 // pred_region
          %v613 = vld [vmem:[#allocation2] sm:$0xf]
          %v614 = vld [vmem:[#allocation11] sm:$0xf]
          %v615 = vld [vmem:[#allocation11 + $0x4] sm:$0xf]
          %v616 = vld [vmem:[#allocation11 + $0x8] sm:$0xf]
          %v617 = vld [vmem:[#allocation11 + $0xc] sm:$0xf]
          %v618 = vld [vmem:[#allocation14] sm:$0x1]
          %v620 = vlaneseq
          %v621 = vshrl.u32 %v620, 7
          %v622 = vsub.s32 0, %v621
          %v623 = vrot.slane %v618, %v622
          %v629 = vunpack.c.l.b16 %v614
          %v630 = vunpack.c.l.b16 %v615
          %v631 = vunpack.c.l.b16 %v616
          %v632 = vunpack.c.l.b16 %v617
          %v633 = vpack.c.b16 %v630, %v629
          %v634 = vpack.c.b16 %v632, %v631
          %vm637 = vcmask 261120
          %v639 = vsel %vm637, %v613, 0
          %641 = vmatprep.subr.bf16.mxu0 0
          %642 = vmatpush1.bf16.msra.mxu0 %v633
          %643 = vmatprep.subr.bf16.mxu0 0
          %644 = vmatpush1.bf16.msra.mxu0 %v634
          %645 = vmatprep.subr.bf16.mxu0 0
          %646 = vmatpush1.bf16.msra.mxu0 0
          %647 = vmatprep.subr.bf16.mxu0 0
          %648 = vmatpush1.bf16.msra.mxu0 0
          %649 = vmatprep.subr.bf16.mxu0 0
          %650 = vmatpush1.bf16.msra.mxu0 0
          %651 = vmatprep.subr.bf16.mxu0 0
          %652 = vmatpush1.bf16.msra.mxu0 0
          %653 = vmatprep.subr.bf16.mxu0 0
          %654 = vmatpush1.bf16.msra.mxu0 0
          %655 = vmatprep.subr.bf16.mxu0 0
          %656 = vmatpush1.bf16.msra.mxu0 0
          %657 = vmatprep.subr.bf16.mxu0 0
          %658 = vmatpush1.bf16.msra.mxu0 0
          %659 = vmatprep.subr.bf16.mxu0 0
          %660 = vmatpush1.bf16.msra.mxu0 0
          %661 = vmatprep.subr.bf16.mxu0 0
          %662 = vmatpush1.bf16.msra.mxu0 0
          %663 = vmatprep.subr.bf16.mxu0 0
          %664 = vmatpush1.bf16.msra.mxu0 0
          %665 = vmatprep.subr.bf16.mxu0 0
          %666 = vmatpush1.bf16.msra.mxu0 0
          %667 = vmatprep.subr.bf16.mxu0 0
          %668 = vmatpush1.bf16.msra.mxu0 0
          %669 = vmatprep.subr.bf16.mxu0 0
          %670 = vmatpush1.bf16.msra.mxu0 0
          %671 = vmatprep.subr.bf16.mxu0 0
          %672 = vmatpush1.bf16.msra.mxu0 0
          %673 = vmatprep.mubr.bf16.mxu0 0
          %674 = vmatmul.mubr.bf16.gmra.mrb[0].mxu0 %v639
          %v675 = vpop.f32.mrb[0].mxu0
          %v676 = vadd.f32 %v623, %v675
          %v677 = vpop.f32.mrb[0].mxu0
          %v678 = vpop.f32.mrb[0].mxu0
          %v679 = vpop.f32.mrb[0].mxu0
          %680 = vdwg.mxu0
          %v681 = vpack.c.bf16 %v676, %v676
          %s682 = smul.addr %s38, 4
          %s683 = scalar_lea.vmem [#allocation3], %s682
          %vm684 = vcmask 257024
          %685 = vst.msk [vmem:[%s683] sm:$0xf] %vm684, %v681
          %v686 = vld [vmem:[%s561] sm:$0xf]
          %v687 = vld [vmem:[%s561 + $0x4] sm:$0xf]
          %v688 = vld [vmem:[%s561 + $0x8] sm:$0xf]
          %v689 = vld [vmem:[%s561 + $0xc] sm:$0xf]
          %v690 = vld [vmem:[#allocation15] sm:$0x1]
          %v692 = vlaneseq
          %v693 = vshrl.u32 %v692, 7
          %v694 = vsub.s32 0, %v693
          %v695 = vrot.slane %v690, %v694
          %v701 = vunpack.c.l.b16 %v686
          %v702 = vunpack.c.l.b16 %v687
          %v703 = vunpack.c.l.b16 %v688
          %v704 = vunpack.c.l.b16 %v689
          %v705 = vpack.c.b16 %v702, %v701
          %v706 = vpack.c.b16 %v704, %v703
          %709 = vmatprep.subr.bf16.mxu0 0
          %710 = vmatpush1.bf16.msra.mxu0 %v705
          %711 = vmatprep.subr.bf16.mxu0 0
          %712 = vmatpush1.bf16.msra.mxu0 %v706
          %713 = vmatprep.subr.bf16.mxu0 0
          %714 = vmatpush1.bf16.msra.mxu0 0
          %715 = vmatprep.subr.bf16.mxu0 0
          %716 = vmatpush1.bf16.msra.mxu0 0
          %717 = vmatprep.subr.bf16.mxu0 0
          %718 = vmatpush1.bf16.msra.mxu0 0
          %719 = vmatprep.subr.bf16.mxu0 0
          %720 = vmatpush1.bf16.msra.mxu0 0
          %721 = vmatprep.subr.bf16.mxu0 0
          %722 = vmatpush1.bf16.msra.mxu0 0
          %723 = vmatprep.subr.bf16.mxu0 0
          %724 = vmatpush1.bf16.msra.mxu0 0
          %725 = vmatprep.subr.bf16.mxu0 0
          %726 = vmatpush1.bf16.msra.mxu0 0
          %727 = vmatprep.subr.bf16.mxu0 0
          %728 = vmatpush1.bf16.msra.mxu0 0
          %729 = vmatprep.subr.bf16.mxu0 0
          %730 = vmatpush1.bf16.msra.mxu0 0
          %731 = vmatprep.subr.bf16.mxu0 0
          %732 = vmatpush1.bf16.msra.mxu0 0
          %733 = vmatprep.subr.bf16.mxu0 0
          %734 = vmatpush1.bf16.msra.mxu0 0
          %735 = vmatprep.subr.bf16.mxu0 0
          %736 = vmatpush1.bf16.msra.mxu0 0
          %737 = vmatprep.subr.bf16.mxu0 0
          %738 = vmatpush1.bf16.msra.mxu0 0
          %739 = vmatprep.subr.bf16.mxu0 0
          %740 = vmatpush1.bf16.msra.mxu0 0
          %741 = vmatprep.mubr.bf16.mxu0 0
          %742 = vmatmul.mubr.bf16.gmra.mrb[0].mxu0 %v639
          %v743 = vpop.f32.mrb[0].mxu0
          %v744 = vadd.f32 %v695, %v743
          %v745 = vpop.f32.mrb[0].mxu0
          %v746 = vpop.f32.mrb[0].mxu0
          %v747 = vpop.f32.mrb[0].mxu0
          %748 = vdwg.mxu0
          %v749 = vpack.c.bf16 %v744, %v744
          %s750 = smul.addr %s38, 4
          %s751 = scalar_lea.vmem [#allocation4], %s750
          %752 = vst.msk [vmem:[%s751] sm:$0xf] %vm684, %v749
        $region96: #{tpu_custom_call.1} parent=63 // pred_fallthru
          _
        %s753 = smul.u32 %s37, 8
        %s754 = sshra.s32 %s753, 3
        %s755 = sand.u32 %s753, 7
        %s756 = smul.addr %s754, 4
        %s757 = scalar_lea.vmem [#allocation2], %s756
        %v758 = vld [vmem:[%s757] sm:$0xf]
        // Predicated region
        $region97: #{tpu_custom_call.1} parent=63 // pred_check
          %p759 = pneg %p569
        $region98: #{tpu_custom_call.1} parent=63 // pred_check_branch
          %761 = sbr.rel (%p759) target = $region100
        $region99: #{tpu_custom_call.1} parent=63 // pred_region
          %s762 = smul.addr %s754, 4
          %s763 = scalar_lea.vmem %s488, %s762 [#allocation6]
          %v764 = vld [vmem:[%s763] sm:$0xf]
          %v765 = vunpack.c.l.bf16 %v764
          %vm766 = vcmask 261120
          %767 = vst.msk [vmem:[#allocation5] sm:$0xff] %vm766, %v765
        $region100: #{tpu_custom_call.1} parent=63 // pred_fallthru
          _
        %v768 = vld [vmem:[#allocation9] sm:$0xf]
        %v769 = vld [vmem:[#allocation9 + $0x4] sm:$0xf]
        %v770 = vld [vmem:[#allocation9 + $0x8] sm:$0xf]
        %v771 = vld [vmem:[#allocation9 + $0xc] sm:$0xf]
        %v772 = vld [vmem:[#allocation12] sm:$0x1]
        %v774 = vlaneseq
        %v775 = vshrl.u32 %v774, 7
        %v776 = vsub.s32 0, %v775
        %v777 = vrot.slane %v772, %v776
        %v783 = vunpack.c.l.b16 %v768
        %v784 = vunpack.c.l.b16 %v769
        %v785 = vunpack.c.l.b16 %v770
        %v786 = vunpack.c.l.b16 %v771
        %v787 = vpack.c.b16 %v784, %v783
        %v788 = vpack.c.b16 %v786, %v785
        %vm791 = vcmask 261120
        %v793 = vsel %vm791, %v758, 0
        %795 = vmatprep.subr.bf16.mxu0 0
        %796 = vmatpush1.bf16.msra.mxu0 %v787
        %797 = vmatprep.subr.bf16.mxu0 0
        %798 = vmatpush1.bf16.msra.mxu0 %v788
        %799 = vmatprep.subr.bf16.mxu0 0
        %800 = vmatpush1.bf16.msra.mxu0 0
        %801 = vmatprep.subr.bf16.mxu0 0
        %802 = vmatpush1.bf16.msra.mxu0 0
        %803 = vmatprep.subr.bf16.mxu0 0
        %804 = vmatpush1.bf16.msra.mxu0 0
        %805 = vmatprep.subr.bf16.mxu0 0
        %806 = vmatpush1.bf16.msra.mxu0 0
        %807 = vmatprep.subr.bf16.mxu0 0
        %808 = vmatpush1.bf16.msra.mxu0 0
        %809 = vmatprep.subr.bf16.mxu0 0
        %810 = vmatpush1.bf16.msra.mxu0 0
        %811 = vmatprep.subr.bf16.mxu0 0
        %812 = vmatpush1.bf16.msra.mxu0 0
        %813 = vmatprep.subr.bf16.mxu0 0
        %814 = vmatpush1.bf16.msra.mxu0 0
        %815 = vmatprep.subr.bf16.mxu0 0
        %816 = vmatpush1.bf16.msra.mxu0 0
        %817 = vmatprep.subr.bf16.mxu0 0
        %818 = vmatpush1.bf16.msra.mxu0 0
        %819 = vmatprep.subr.bf16.mxu0 0
        %820 = vmatpush1.bf16.msra.mxu0 0
        %821 = vmatprep.subr.bf16.mxu0 0
        %822 = vmatpush1.bf16.msra.mxu0 0
        %823 = vmatprep.subr.bf16.mxu0 0
        %824 = vmatpush1.bf16.msra.mxu0 0
        %825 = vmatprep.subr.bf16.mxu0 0
        %826 = vmatpush1.bf16.msra.mxu0 0
        %827 = vmatprep.mubr.bf16.mxu0 0
        %828 = vmatmul.mubr.bf16.gmra.mrb[0].mxu0 %v793
        %v829 = vpop.f32.mrb[0].mxu0
        %v830 = vadd.f32 %v777, %v829
        %v831 = vpop.f32.mrb[0].mxu0
        %v832 = vpop.f32.mrb[0].mxu0
        %v833 = vpop.f32.mrb[0].mxu0
        %834 = vdwg.mxu0
        %v835 = vmul.f32 %v830, 0.35355338
        %v836 = vpack.c.bf16 %v835, %v835
        %v837 = vlaneseq
        %v838 = vshrl.u32 %v837, 7
        %v839 = vstv %s753
        %v840 = vadd.s32 %v838, %v839
        %v841 = vlaneseq
        %v842 = vand.u32 %v841, 127
        %vm843 = vcmp.gt.s32.totalorder %v842, %v840
        %s844 = smul.addr %s38, 4
        %s845 = scalar_lea.vmem [#allocation3], %s844
        %v846 = vld [vmem:[%s845] sm:$0xf]
        %s847 = smul.addr %s38, 4
        %s848 = scalar_lea.vmem [#allocation4], %s847
        %v849 = vld [vmem:[%s848] sm:$0xf]
        %vm850 = vcmask 64512
        %v852 = vsel %vm850, %v836, 0
        %v855 = vsel %vm850, %v846, 0
        %857 = vmatprep.subr.bf16.mxu0 0
        %858 = vmatpush1.bf16.xpose.msra.mxu0 %v855
        %859 = vmatprep.subr.bf16.mxu0 0
        %860 = vmatpush1.bf16.xpose.msra.mxu0 0
        %861 = vmatprep.subr.bf16.mxu0 0
        %862 = vmatpush1.bf16.xpose.msra.mxu0 0
        %863 = vmatprep.subr.bf16.mxu0 0
        %864 = vmatpush1.bf16.xpose.msra.mxu0 0
        %865 = vmatprep.subr.bf16.mxu0 0
        %866 = vmatpush1.bf16.xpose.msra.mxu0 0
        %867 = vmatprep.subr.bf16.mxu0 0
        %868 = vmatpush1.bf16.xpose.msra.mxu0 0
        %869 = vmatprep.subr.bf16.mxu0 0
        %870 = vmatpush1.bf16.xpose.msra.mxu0 0
        %871 = vmatprep.subr.bf16.mxu0 0
        %872 = vmatpush1.bf16.xpose.msra.mxu0 0
        %873 = vmatprep.subr.bf16.mxu0 0
        %874 = vmatpush1.bf16.xpose.msra.mxu0 0
        %875 = vmatprep.subr.bf16.mxu0 0
        %876 = vmatpush1.bf16.xpose.msra.mxu0 0
        %877 = vmatprep.subr.bf16.mxu0 0
        %878 = vmatpush1.bf16.xpose.msra.mxu0 0
        %879 = vmatprep.subr.bf16.mxu0 0
        %880 = vmatpush1.bf16.xpose.msra.mxu0 0
        %881 = vmatprep.subr.bf16.mxu0 0
        %882 = vmatpush1.bf16.xpose.msra.mxu0 0
        %883 = vmatprep.subr.bf16.mxu0 0
        %884 = vmatpush1.bf16.xpose.msra.mxu0 0
        %885 = vmatprep.subr.bf16.mxu0 0
        %886 = vmatpush1.bf16.xpose.msra.mxu0 0
        %887 = vmatprep.subr.bf16.mxu0 0
        %888 = vmatpush1.bf16.xpose.msra.mxu0 0
        %889 = vmatprep.mubr.bf16.mxu0 0
        %890 = vmatmul.mubr.bf16.gmra.mrb[0].mxu0 %v852
        %v891 = vpop.f32.mrb[0].mxu0
        %v892 = vadd.f32 0.0, %v891
        %v893 = vpop.f32.mrb[0].mxu0
        %v894 = vpop.f32.mrb[0].mxu0
        %v895 = vpop.f32.mrb[0].mxu0
        %896 = vdwg.mxu0
        %v897 = vsel %vm843, -1e+30, %v892
        %v898 = vsel %vm850, %v897, -inf
        %899 = vmax.xlane.f32.xlu0 %v898
        %v900 = vpop.xlane.xlu0 %899
        %v901 = vsub.f32 %v897, %v900
        %v902 = vmul.f32 %v901, 1.442695
        %v903 = vpow.pop %v902
        %v904 = vsel %vm850, %v903, 0.0
        %905 = vadd.xlane.f32.xlu0 %v904
        %v906 = vpop.xlane.xlu0 %905
        %v907 = vrcp.pop %v906
        %v908 = vmul.f32 %v903, %v907
        %v909 = vpack.c.bf16 %v908, %v908
        %v911 = vsel %vm850, %v909, 0
        %vm913 = vcmask 1043456
        %v915 = vsel %vm913, %v849, 0
        %917 = vmatprep.subr.bf16.mxu0 0
        %918 = vmatpush1.bf16.msra.mxu0 %v915
        %919 = vmatprep.subr.bf16.mxu0 0
        %920 = vmatpush1.bf16.msra.mxu0 0
        %921 = vmatprep.subr.bf16.mxu0 0
        %922 = vmatpush1.bf16.msra.mxu0 0
        %923 = vmatprep.subr.bf16.mxu0 0
        %924 = vmatpush1.bf16.msra.mxu0 0
        %925 = vmatprep.subr.bf16.mxu0 0
        %926 = vmatpush1.bf16.msra.mxu0 0
        %927 = vmatprep.subr.bf16.mxu0 0
        %928 = vmatpush1.bf16.msra.mxu0 0
        %929 = vmatprep.subr.bf16.mxu0 0
        %930 = vmatpush1.bf16.msra.mxu0 0
        %931 = vmatprep.subr.bf16.mxu0 0
        %932 = vmatpush1.bf16.msra.mxu0 0
        %933 = vmatprep.subr.bf16.mxu0 0
        %934 = vmatpush1.bf16.msra.mxu0 0
        %935 = vmatprep.subr.bf16.mxu0 0
        %936 = vmatpush1.bf16.msra.mxu0 0
        %937 = vmatprep.subr.bf16.mxu0 0
        %938 = vmatpush1.bf16.msra.mxu0 0
        %939 = vmatprep.subr.bf16.mxu0 0
        %940 = vmatpush1.bf16.msra.mxu0 0
        %941 = vmatprep.subr.bf16.mxu0 0
        %942 = vmatpush1.bf16.msra.mxu0 0
        %943 = vmatprep.subr.bf16.mxu0 0
        %944 = vmatpush1.bf16.msra.mxu0 0
        %945 = vmatprep.subr.bf16.mxu0 0
        %946 = vmatpush1.bf16.msra.mxu0 0
        %947 = vmatprep.subr.bf16.mxu0 0
        %948 = vmatpush1.bf16.msra.mxu0 0
        %949 = vmatprep.mubr.bf16.mxu0 0
        %950 = vmatmul.mubr.bf16.gmra.mrb[0].mxu0 %v911
        %v951 = vpop.f32.mrb[0].mxu0
        %v952 = vadd.f32 0.0, %v951
        %v953 = vpop.f32.mrb[0].mxu0
        %v954 = vpop.f32.mrb[0].mxu0
        %v955 = vpop.f32.mrb[0].mxu0
        %956 = vdwg.mxu0
        %958 = vrot.lane.b32.xlu0 %v836, 120
        %v959 = vpop.permute.xlu0 %958
        %v961 = vunpack.c.l.b16 %v846
        %v962 = vpack.c.b16 %v961, %v961
        %963 = vrot.lane.b32.xlu0 %v962, 120
        %v964 = vpop.permute.xlu0 %963
        %v966 = vsel %vm850, %v959, 0
        %v969 = vsel %vm850, %v964, 0
        %971 = vmatprep.subr.bf16.mxu0 0
        %972 = vmatpush1.bf16.xpose.msra.mxu0 %v969
        %973 = vmatprep.subr.bf16.mxu0 0
        %974 = vmatpush1.bf16.xpose.msra.mxu0 0
        %975 = vmatprep.subr.bf16.mxu0 0
        %976 = vmatpush1.bf16.xpose.msra.mxu0 0
        %977 = vmatprep.subr.bf16.mxu0 0
        %978 = vmatpush1.bf16.xpose.msra.mxu0 0
        %979 = vmatprep.subr.bf16.mxu0 0
        %980 = vmatpush1.bf16.xpose.msra.mxu0 0
        %981 = vmatprep.subr.bf16.mxu0 0
        %982 = vmatpush1.bf16.xpose.msra.mxu0 0
        %983 = vmatprep.subr.bf16.mxu0 0
        %984 = vmatpush1.bf16.xpose.msra.mxu0 0
        %985 = vmatprep.subr.bf16.mxu0 0
        %986 = vmatpush1.bf16.xpose.msra.mxu0 0
        %987 = vmatprep.subr.bf16.mxu0 0
        %988 = vmatpush1.bf16.xpose.msra.mxu0 0
        %989 = vmatprep.subr.bf16.mxu0 0
        %990 = vmatpush1.bf16.xpose.msra.mxu0 0
        %991 = vmatprep.subr.bf16.mxu0 0
        %992 = vmatpush1.bf16.xpose.msra.mxu0 0
        %993 = vmatprep.subr.bf16.mxu0 0
        %994 = vmatpush1.bf16.xpose.msra.mxu0 0
        %995 = vmatprep.subr.bf16.mxu0 0
        %996 = vmatpush1.bf16.xpose.msra.mxu0 0
        %997 = vmatprep.subr.bf16.mxu0 0
        %998 = vmatpush1.bf16.xpose.msra.mxu0 0
        %999 = vmatprep.subr.bf16.mxu0 0
        %1000 = vmatpush1.bf16.xpose.msra.mxu0 0
        %1001 = vmatprep.subr.bf16.mxu0 0
        %1002 = vmatpush1.bf16.xpose.msra.mxu0 0
        %1003 = vmatprep.mubr.bf16.mxu0 0
        %1004 = vmatmul.mubr.bf16.gmra.mrb[0].mxu0 %v966
        %v1005 = vpop.f32.mrb[0].mxu0
        %v1006 = vadd.f32 0.0, %v1005
        %v1007 = vpop.f32.mrb[0].mxu0
        %v1008 = vpop.f32.mrb[0].mxu0
        %v1009 = vpop.f32.mrb[0].mxu0
        %1010 = vdwg.mxu0
        %v1011 = vsel %vm843, -1e+30, %v1006
        %v1012 = vsel %vm850, %v1011, -inf
        %1013 = vmax.xlane.f32.xlu0 %v1012
        %v1014 = vpop.xlane.xlu0 %1013
        %v1015 = vsub.f32 %v1011, %v1014
        %v1016 = vmul.f32 %v1015, 1.442695
        %v1017 = vpow.pop %v1016
        %v1018 = vsel %vm850, %v1017, 0.0
        %1019 = vadd.xlane.f32.xlu0 %v1018
        %v1020 = vpop.xlane.xlu0 %1019
        %v1021 = vrcp.pop %v1020
        %v1022 = vmul.f32 %v1017, %v1021
        %v1023 = vpack.c.bf16 %v1022, %v1022
        %v1025 = vunpack.c.l.b16 %v849
        %v1026 = vpack.c.b16 %v1025, %v1025
        %1027 = vrot.lane.b32.xlu0 %v1026, 120
        %v1028 = vpop.permute.xlu0 %1027
        %v1030 = vsel %vm850, %v1023, 0
        %v1033 = vsel %vm913, %v1028, 0
        %1035 = vmatprep.subr.bf16.mxu0 0
        %1036 = vmatpush1.bf16.msra.mxu0 %v1033
        %1037 = vmatprep.subr.bf16.mxu0 0
        %1038 = vmatpush1.bf16.msra.mxu0 0
        %1039 = vmatprep.subr.bf16.mxu0 0
        %1040 = vmatpush1.bf16.msra.mxu0 0
        %1041 = vmatprep.subr.bf16.mxu0 0
        %1042 = vmatpush1.bf16.msra.mxu0 0
        %1043 = vmatprep.subr.bf16.mxu0 0
        %1044 = vmatpush1.bf16.msra.mxu0 0
        %1045 = vmatprep.subr.bf16.mxu0 0
        %1046 = vmatpush1.bf16.msra.mxu0 0
        %1047 = vmatprep.subr.bf16.mxu0 0
        %1048 = vmatpush1.bf16.msra.mxu0 0
        %1049 = vmatprep.subr.bf16.mxu0 0
        %1050 = vmatpush1.bf16.msra.mxu0 0
        %1051 = vmatprep.subr.bf16.mxu0 0
        %1052 = vmatpush1.bf16.msra.mxu0 0
        %1053 = vmatprep.subr.bf16.mxu0 0
        %1054 = vmatpush1.bf16.msra.mxu0 0
        %1055 = vmatprep.subr.bf16.mxu0 0
        %1056 = vmatpush1.bf16.msra.mxu0 0
        %1057 = vmatprep.subr.bf16.mxu0 0
        %1058 = vmatpush1.bf16.msra.mxu0 0
        %1059 = vmatprep.subr.bf16.mxu0 0
        %1060 = vmatpush1.bf16.msra.mxu0 0
        %1061 = vmatprep.subr.bf16.mxu0 0
        %1062 = vmatpush1.bf16.msra.mxu0 0
        %1063 = vmatprep.subr.bf16.mxu0 0
        %1064 = vmatpush1.bf16.msra.mxu0 0
        %1065 = vmatprep.subr.bf16.mxu0 0
        %1066 = vmatpush1.bf16.msra.mxu0 0
        %1067 = vmatprep.mubr.bf16.mxu0 0
        %1068 = vmatmul.mubr.bf16.gmra.mrb[0].mxu0 %v1030
        %v1069 = vpop.f32.mrb[0].mxu0
        %v1070 = vadd.f32 0.0, %v1069
        %v1071 = vpop.f32.mrb[0].mxu0
        %v1072 = vpop.f32.mrb[0].mxu0
        %v1073 = vpop.f32.mrb[0].mxu0
        %1074 = vdwg.mxu0
        %1075 = vrot.lane.b32.xlu0 %v836, 112
        %v1076 = vpop.permute.xlu0 %1075
        %1077 = vrot.lane.b32.xlu0 %v962, 112
        %v1078 = vpop.permute.xlu0 %1077
        %v1080 = vsel %vm850, %v1076, 0
        %v1083 = vsel %vm850, %v1078, 0
        %1085 = vmatprep.subr.bf16.mxu0 0
        %1086 = vmatpush1.bf16.xpose.msra.mxu0 %v1083
        %1087 = vmatprep.subr.bf16.mxu0 0
        %1088 = vmatpush1.bf16.xpose.msra.mxu0 0
        %1089 = vmatprep.subr.bf16.mxu0 0
        %1090 = vmatpush1.bf16.xpose.msra.mxu0 0
        %1091 = vmatprep.subr.bf16.mxu0 0
        %1092 = vmatpush1.bf16.xpose.msra.mxu0 0
        %1093 = vmatprep.subr.bf16.mxu0 0
        %1094 = vmatpush1.bf16.xpose.msra.mxu0 0
        %1095 = vmatprep.subr.bf16.mxu0 0
        %1096 = vmatpush1.bf16.xpose.msra.mxu0 0
        %1097 = vmatprep.subr.bf16.mxu0 0
        %1098 = vmatpush1.bf16.xpose.msra.mxu0 0
        %1099 = vmatprep.subr.bf16.mxu0 0
        %1100 = vmatpush1.bf16.xpose.msra.mxu0 0
        %1101 = vmatprep.subr.bf16.mxu0 0
        %1102 = vmatpush1.bf16.xpose.msra.mxu0 0
        %1103 = vmatprep.subr.bf16.mxu0 0
        %1104 = vmatpush1.bf16.xpose.msra.mxu0 0
        %1105 = vmatprep.subr.bf16.mxu0 0
        %1106 = vmatpush1.bf16.xpose.msra.mxu0 0
        %1107 = vmatprep.subr.bf16.mxu0 0
        %1108 = vmatpush1.bf16.xpose.msra.mxu0 0
        %1109 = vmatprep.subr.bf16.mxu0 0
        %1110 = vmatpush1.bf16.xpose.msra.mxu0 0
        %1111 = vmatprep.subr.bf16.mxu0 0
        %1112 = vmatpush1.bf16.xpose.msra.mxu0 0
        %1113 = vmatprep.subr.bf16.mxu0 0
        %1114 = vmatpush1.bf16.xpose.msra.mxu0 0
        %1115 = vmatprep.subr.bf16.mxu0 0
        %1116 = vmatpush1.bf16.xpose.msra.mxu0 0
        %1117 = vmatprep.mubr.bf16.mxu0 0
        %1118 = vmatmul.mubr.bf16.gmra.mrb[0].mxu0 %v1080
        %v1119 = vpop.f32.mrb[0].mxu0
        %v1120 = vadd.f32 0.0, %v1119
        %v1121 = vpop.f32.mrb[0].mxu0
        %v1122 = vpop.f32.mrb[0].mxu0
        %v1123 = vpop.f32.mrb[0].mxu0
        %1124 = vdwg.mxu0
        %v1125 = vsel %vm843, -1e+30, %v1120
        %v1126 = vsel %vm850, %v1125, -inf
        %1127 = vmax.xlane.f32.xlu0 %v1126
        %v1128 = vpop.xlane.xlu0 %1127
        %v1129 = vsub.f32 %v1125, %v1128
        %v1130 = vmul.f32 %v1129, 1.442695
        %v1131 = vpow.pop %v1130
        %v1132 = vsel %vm850, %v1131, 0.0
        %1133 = vadd.xlane.f32.xlu0 %v1132
        %v1134 = vpop.xlane.xlu0 %1133
        %v1135 = vrcp.pop %v1134
        %v1136 = vmul.f32 %v1131, %v1135
        %v1137 = vpack.c.bf16 %v1136, %v1136
        %1138 = vrot.lane.b32.xlu0 %v1026, 112
        %v1139 = vpop.permute.xlu0 %1138
        %v1141 = vsel %vm850, %v1137, 0
        %v1144 = vsel %vm913, %v1139, 0
        %1146 = vmatprep.subr.bf16.mxu0 0
        %1147 = vmatpush1.bf16.msra.mxu0 %v1144
        %1148 = vmatprep.subr.bf16.mxu0 0
        %1149 = vmatpush1.bf16.msra.mxu0 0
        %1150 = vmatprep.subr.bf16.mxu0 0
        %1151 = vmatpush1.bf16.msra.mxu0 0
        %1152 = vmatprep.subr.bf16.mxu0 0
        %1153 = vmatpush1.bf16.msra.mxu0 0
        %1154 = vmatprep.subr.bf16.mxu0 0
        %1155 = vmatpush1.bf16.msra.mxu0 0
        %1156 = vmatprep.subr.bf16.mxu0 0
        %1157 = vmatpush1.bf16.msra.mxu0 0
        %1158 = vmatprep.subr.bf16.mxu0 0
        %1159 = vmatpush1.bf16.msra.mxu0 0
        %1160 = vmatprep.subr.bf16.mxu0 0
        %1161 = vmatpush1.bf16.msra.mxu0 0
        %1162 = vmatprep.subr.bf16.mxu0 0
        %1163 = vmatpush1.bf16.msra.mxu0 0
        %1164 = vmatprep.subr.bf16.mxu0 0
        %1165 = vmatpush1.bf16.msra.mxu0 0
        %1166 = vmatprep.subr.bf16.mxu0 0
        %1167 = vmatpush1.bf16.msra.mxu0 0
        %1168 = vmatprep.subr.bf16.mxu0 0
        %1169 = vmatpush1.bf16.msra.mxu0 0
        %1170 = vmatprep.subr.bf16.mxu0 0
        %1171 = vmatpush1.bf16.msra.mxu0 0
        %1172 = vmatprep.subr.bf16.mxu0 0
        %1173 = vmatpush1.bf16.msra.mxu0 0
        %1174 = vmatprep.subr.bf16.mxu0 0
        %1175 = vmatpush1.bf16.msra.mxu0 0
        %1176 = vmatprep.subr.bf16.mxu0 0
        %1177 = vmatpush1.bf16.msra.mxu0 0
        %1178 = vmatprep.mubr.bf16.mxu0 0
        %1179 = vmatmul.mubr.bf16.gmra.mrb[0].mxu0 %v1141
        %v1180 = vpop.f32.mrb[0].mxu0
        %v1181 = vadd.f32 0.0, %v1180
        %v1182 = vpop.f32.mrb[0].mxu0
        %v1183 = vpop.f32.mrb[0].mxu0
        %v1184 = vpop.f32.mrb[0].mxu0
        %1185 = vdwg.mxu0
        %1186 = vrot.lane.b32.xlu0 %v836, 104
        %v1187 = vpop.permute.xlu0 %1186
        %1188 = vrot.lane.b32.xlu0 %v962, 104
        %v1189 = vpop.permute.xlu0 %1188
        %v1191 = vsel %vm850, %v1187, 0
        %v1194 = vsel %vm850, %v1189, 0
        %1196 = vmatprep.subr.bf16.mxu0 0
        %1197 = vmatpush1.bf16.xpose.msra.mxu0 %v1194
        %1198 = vmatprep.subr.bf16.mxu0 0
        %1199 = vmatpush1.bf16.xpose.msra.mxu0 0
        %1200 = vmatprep.subr.bf16.mxu0 0
        %1201 = vmatpush1.bf16.xpose.msra.mxu0 0
        %1202 = vmatprep.subr.bf16.mxu0 0
        %1203 = vmatpush1.bf16.xpose.msra.mxu0 0
        %1204 = vmatprep.subr.bf16.mxu0 0
        %1205 = vmatpush1.bf16.xpose.msra.mxu0 0
        %1206 = vmatprep.subr.bf16.mxu0 0
        %1207 = vmatpush1.bf16.xpose.msra.mxu0 0
        %1208 = vmatprep.subr.bf16.mxu0 0
        %1209 = vmatpush1.bf16.xpose.msra.mxu0 0
        %1210 = vmatprep.subr.bf16.mxu0 0
        %1211 = vmatpush1.bf16.xpose.msra.mxu0 0
        %1212 = vmatprep.subr.bf16.mxu0 0
        %1213 = vmatpush1.bf16.xpose.msra.mxu0 0
        %1214 = vmatprep.subr.bf16.mxu0 0
        %1215 = vmatpush1.bf16.xpose.msra.mxu0 0
        %1216 = vmatprep.subr.bf16.mxu0 0
        %1217 = vmatpush1.bf16.xpose.msra.mxu0 0
        %1218 = vmatprep.subr.bf16.mxu0 0
        %1219 = vmatpush1.bf16.xpose.msra.mxu0 0
        %1220 = vmatprep.subr.bf16.mxu0 0
        %1221 = vmatpush1.bf16.xpose.msra.mxu0 0
        %1222 = vmatprep.subr.bf16.mxu0 0
        %1223 = vmatpush1.bf16.xpose.msra.mxu0 0
        %1224 = vmatprep.subr.bf16.mxu0 0
        %1225 = vmatpush1.bf16.xpose.msra.mxu0 0
        %1226 = vmatprep.subr.bf16.mxu0 0
        %1227 = vmatpush1.bf16.xpose.msra.mxu0 0
        %1228 = vmatprep.mubr.bf16.mxu0 0
        %1229 = vmatmul.mubr.bf16.gmra.mrb[0].mxu0 %v1191
        %v1230 = vpop.f32.mrb[0].mxu0
        %v1231 = vadd.f32 0.0, %v1230
        %v1232 = vpop.f32.mrb[0].mxu0
        %v1233 = vpop.f32.mrb[0].mxu0
        %v1234 = vpop.f32.mrb[0].mxu0
        %1235 = vdwg.mxu0
        %v1236 = vsel %vm843, -1e+30, %v1231
        %v1237 = vsel %vm850, %v1236, -inf
        %1238 = vmax.xlane.f32.xlu0 %v1237
        %v1239 = vpop.xlane.xlu0 %1238
        %v1240 = vsub.f32 %v1236, %v1239
        %v1241 = vmul.f32 %v1240, 1.442695
        %v1242 = vpow.pop %v1241
        %v1243 = vsel %vm850, %v1242, 0.0
        %1244 = vadd.xlane.f32.xlu0 %v1243
        %v1245 = vpop.xlane.xlu0 %1244
        %v1246 = vrcp.pop %v1245
        %v1247 = vmul.f32 %v1242, %v1246
        %v1248 = vpack.c.bf16 %v1247, %v1247
        %1249 = vrot.lane.b32.xlu0 %v1026, 104
        %v1250 = vpop.permute.xlu0 %1249
        %v1252 = vsel %vm850, %v1248, 0
        %v1255 = vsel %vm913, %v1250, 0
        %1257 = vmatprep.subr.bf16.mxu0 0
        %1258 = vmatpush1.bf16.msra.mxu0 %v1255
        %1259 = vmatprep.subr.bf16.mxu0 0
        %1260 = vmatpush1.bf16.msra.mxu0 0
        %1261 = vmatprep.subr.bf16.mxu0 0
        %1262 = vmatpush1.bf16.msra.mxu0 0
        %1263 = vmatprep.subr.bf16.mxu0 0
        %1264 = vmatpush1.bf16.msra.mxu0 0
        %1265 = vmatprep.subr.bf16.mxu0 0
        %1266 = vmatpush1.bf16.msra.mxu0 0
        %1267 = vmatprep.subr.bf16.mxu0 0
        %1268 = vmatpush1.bf16.msra.mxu0 0
        %1269 = vmatprep.subr.bf16.mxu0 0
        %1270 = vmatpush1.bf16.msra.mxu0 0
        %1271 = vmatprep.subr.bf16.mxu0 0
        %1272 = vmatpush1.bf16.msra.mxu0 0
        %1273 = vmatprep.subr.bf16.mxu0 0
        %1274 = vmatpush1.bf16.msra.mxu0 0
        %1275 = vmatprep.subr.bf16.mxu0 0
        %1276 = vmatpush1.bf16.msra.mxu0 0
        %1277 = vmatprep.subr.bf16.mxu0 0
        %1278 = vmatpush1.bf16.msra.mxu0 0
        %1279 = vmatprep.subr.bf16.mxu0 0
        %1280 = vmatpush1.bf16.msra.mxu0 0
        %1281 = vmatprep.subr.bf16.mxu0 0
        %1282 = vmatpush1.bf16.msra.mxu0 0
        %1283 = vmatprep.subr.bf16.mxu0 0
        %1284 = vmatpush1.bf16.msra.mxu0 0
        %1285 = vmatprep.subr.bf16.mxu0 0
        %1286 = vmatpush1.bf16.msra.mxu0 0
        %1287 = vmatprep.subr.bf16.mxu0 0
        %1288 = vmatpush1.bf16.msra.mxu0 0
        %1289 = vmatprep.mubr.bf16.mxu0 0
        %1290 = vmatmul.mubr.bf16.gmra.mrb[0].mxu0 %v1252
        %v1291 = vpop.f32.mrb[0].mxu0
        %v1292 = vadd.f32 0.0, %v1291
        %v1293 = vpop.f32.mrb[0].mxu0
        %v1294 = vpop.f32.mrb[0].mxu0
        %v1295 = vpop.f32.mrb[0].mxu0
        %1296 = vdwg.mxu0
        %1298 = vrot.lane.b32.xlu0 %v1070, 8
        %v1299 = vpop.permute.xlu0 %1298
        %1302 = vrot.lane.b32.xlu0 %v1181, 16
        %v1303 = vpop.permute.xlu0 %1302
        %1306 = vrot.lane.b32.xlu0 %v1292, 24
        %v1307 = vpop.permute.xlu0 %1306
        %v1309 = vsel %vm850, %v952, %v1299
        %vm1310 = vcmask 130048
        %v1311 = vsel %vm1310, %v1309, %v1303
        %vm1312 = vcmask 195584
        %v1313 = vsel %vm1312, %v1311, %v1307
        %v1314 = vpack.c.bf16 %v1313, %v1313
        %v1315 = vld [vmem:[#allocation5] sm:$0xff]
        %v1316 = vld [vmem:[%s566] sm:$0xf]
        %v1317 = vld [vmem:[%s566 + $0x4] sm:$0xf]
        %v1318 = vld [vmem:[%s566 + $0x8] sm:$0xf]
        %v1319 = vld [vmem:[%s566 + $0xc] sm:$0xf]
        %v1324 = vunpack.c.l.b16 %v1316
        %v1325 = vunpack.c.l.b16 %v1317
        %v1326 = vunpack.c.l.b16 %v1318
        %v1327 = vunpack.c.l.b16 %v1319
        %v1328 = vpack.c.b16 %v1325, %v1324
        %v1329 = vpack.c.b16 %v1327, %v1326
        %v1333 = vsel %vm791, %v1314, 0
        %1335 = vmatprep.subr.bf16.mxu0 0
        %1336 = vmatpush1.bf16.msra.mxu0 %v1328
        %1337 = vmatprep.subr.bf16.mxu0 0
        %1338 = vmatpush1.bf16.msra.mxu0 %v1329
        %1339 = vmatprep.subr.bf16.mxu0 0
        %1340 = vmatpush1.bf16.msra.mxu0 0
        %1341 = vmatprep.subr.bf16.mxu0 0
        %1342 = vmatpush1.bf16.msra.mxu0 0
        %1343 = vmatprep.subr.bf16.mxu0 0
        %1344 = vmatpush1.bf16.msra.mxu0 0
        %1345 = vmatprep.subr.bf16.mxu0 0
        %1346 = vmatpush1.bf16.msra.mxu0 0
        %1347 = vmatprep.subr.bf16.mxu0 0
        %1348 = vmatpush1.bf16.msra.mxu0 0
        %1349 = vmatprep.subr.bf16.mxu0 0
        %1350 = vmatpush1.bf16.msra.mxu0 0
        %1351 = vmatprep.subr.bf16.mxu0 0
        %1352 = vmatpush1.bf16.msra.mxu0 0
        %1353 = vmatprep.subr.bf16.mxu0 0
        %1354 = vmatpush1.bf16.msra.mxu0 0
        %1355 = vmatprep.subr.bf16.mxu0 0
        %1356 = vmatpush1.bf16.msra.mxu0 0
        %1357 = vmatprep.subr.bf16.mxu0 0
        %1358 = vmatpush1.bf16.msra.mxu0 0
        %1359 = vmatprep.subr.bf16.mxu0 0
        %1360 = vmatpush1.bf16.msra.mxu0 0
        %1361 = vmatprep.subr.bf16.mxu0 0
        %1362 = vmatpush1.bf16.msra.mxu0 0
        %1363 = vmatprep.subr.bf16.mxu0 0
        %1364 = vmatpush1.bf16.msra.mxu0 0
        %1365 = vmatprep.subr.bf16.mxu0 0
        %1366 = vmatpush1.bf16.msra.mxu0 0
        %1367 = vmatprep.mubr.bf16.mxu0 0
        %1368 = vmatmul.mubr.bf16.gmra.mrb[0].mxu0 %v1333
        %v1369 = vpop.f32.mrb[0].mxu0
        %v1370 = vadd.f32 0.0, %v1369
        %v1371 = vpop.f32.mrb[0].mxu0
        %v1372 = vpop.f32.mrb[0].mxu0
        %v1373 = vpop.f32.mrb[0].mxu0
        %1374 = vdwg.mxu0
        %v1375 = vadd.f32 %v1315, %v1370
        %1376 = vst.msk [vmem:[#allocation5] sm:$0xff] %vm791, %v1375
        // Predicated region
        $region101: #{tpu_custom_call.1} parent=63 // pred_check
          %p1377 = pneg %p569
        $region102: #{tpu_custom_call.1} parent=63 // pred_check_branch
          %1379 = sbr.rel (%p1377) target = $region104
        $region103: #{tpu_custom_call.1} parent=63 // pred_region
          %v1380 = vld [vmem:[#allocation5] sm:$0xff]
          %v1381 = vld [vmem:[%s10] sm:$0x1]
          %v1383 = vlaneseq
          %v1384 = vshrl.u32 %v1383, 7
          %v1385 = vsub.s32 0, %v1384
          %v1386 = vrot.slane %v1381, %v1385
          %v1388 = vadd.f32 %v1380, %v1386
          %v1389 = vpack.c.bf16 %v1388, %v1388
          %vm1390 = vcmask 257024
          %1391 = vst.msk [vmem:[%s556] sm:$0xf] %vm1390, %v1389
        $region104: #{tpu_custom_call.1} parent=63 // pred_fallthru
          _
        %s1392 = sand.u32 %s331, 1
        %s1393 = scalar_lea.sflag [#allocation8], %s1392
        %s1394 = sand.u32 %s331, 1
        %s1395 = smul.addr %s1394, 4
        %s1396 = scalar_lea.vmem [#allocation17], %s1395
        // Predicated region
        $region105: #{tpu_custom_call.1} parent=63 // pred_check
          %p1397 = pneg %p341
        $region106: #{tpu_custom_call.1} parent=63 // pred_check_branch
          %1399 = sbr.rel (%p1397) target = $region108
        $region107: #{tpu_custom_call.1} parent=63 // pred_region
          %s1401 = ssub.s32 64, 64
          %1402 = vsyncadd %s1393, %s1401
          %s1403 = sadd.s32 %s37, %s36
          %s1404 = smul.addr %s1403, 64
          %s1405 = scalar_lea.hbm %s11, %s1404
          %s1407 = sshll.u32 %s1396, 4
          %s1408 = int_to_ptr.vmem [resolvable:$true] %s1407
          %1410 = dma.vmem_to_hbm [thread:$0]  %s1408, 64, %s1405, %s1393
        $region108: #{tpu_custom_call.1} parent=63 // pred_fallthru
          _
      $region64: #{tpu_custom_call.1} parent=5 // pred_fallthru
        _
      %p1411 = scmp.le.s32.totalorder 2, %s26
      // Predicated region
      $region109: #{tpu_custom_call.1} parent=5 // pred_check
        %p1412 = pneg %p1411
      $region110: #{tpu_custom_call.1} parent=5 // pred_check_branch
        %1414 = sbr.rel (%p1412) target = $region112
      $region111: #{tpu_custom_call.1} parent=5 // pred_region
        %s1415 = ssub.s32 %s26, 2
        // Predicated region
        $region113: #{tpu_custom_call.1} parent=111 // pred_check
          %p1416 = pneg %p347
        $region114: #{tpu_custom_call.1} parent=111 // pred_check_branch
          %1418 = sbr.rel (%p1416) target = $region116
        $region115: #{tpu_custom_call.1} parent=111 // pred_region
          %s1419 = sand.u32 %s332, 1
          %s1420 = scalar_lea.sflag [#allocation8], %s1419
          %s1421 = sand.u32 %s332, 1
          %s1422 = smul.addr %s1421, 4
          %s1423 = scalar_lea.vmem [#allocation17], %s1422
          %1424 = dma.done %s1420, 64
        $region116: #{tpu_custom_call.1} parent=111 // pred_fallthru
          _
      $region112: #{tpu_custom_call.1} parent=5 // pred_fallthru
        _
    $region6: #{tpu_custom_call.1} parent=1 // loop_footer
      %s30 = sadd.s32 1, %s26
    $region7: #{tpu_custom_call.1} parent=1 // loop_footer_branch
      %25 = sbr.rel target = $region3
    $region8: #{tpu_custom_call.1} parent=1 // loop_exit
      _
    %1425 = vsyncpa [#allocation7], 1
    %s1426 = scalar_lea.sflag [#allocation7], 1
    %1427 = vsyncpa %s1426, 1
    %1428 = vsyncpa [#allocation10], 1
    %1429 = vsyncpa [#allocation13], 1
    %1430 = vsyncpa [#allocation16], 1
    %1431 = vsyncpa [#allocation8], 1
    %s1432 = scalar_lea.sflag [#allocation8], 1
    %1433 = vsyncpa %s1432, 1

</llo_original>
